<compile_context>
chip_gen: v5e
topology: v5e:2x2
jax: 0.10.0
libtpu: 0.0.40
codegen_flags: <defaults>
</compile_context>

<pallas_src>
import functools

import jax
import jax.numpy as jnp
import numpy as np
from jax import lax
from jax.experimental import pallas as pl
from jax.experimental.pallas import tpu as pltpu

K_ITERS = 35  # self.k in the module


def mvprop_kernel(hp_w_ref, p_w_ref, bias_ref, x_ref, v_ref, p_ref, *,
                  H, W, vi_unroll):
    # x_ref: (1, 2, Hs, P) with Hs = Tb*H (Tb slabs stacked along rows) and
    # P = bt*W (bt maps packed along lanes). Channel 0 = wall maps, 1 = goals.
    _, _, Hs, P = x_ref.shape

    # Periodic boundary masks so packed maps never bleed into each other's
    # conv/pool halos: col % W along lanes, row % H along sublanes.
    row = lax.broadcasted_iota(jnp.int32, (Hs, P), 0) % H
    col = lax.broadcasted_iota(jnp.int32, (Hs, P), 1) % W
    not_left = col > 0        # source j-1 stays inside the same map
    not_right = col < W - 1   # source j+1 stays inside the same map
    not_top = row > 0
    not_bot = row < H - 1

    def shift_h(x, dx, pad):
        # out[i, j] = x[i, j+dx] if the source stays inside the same map, else pad
        rolled = pltpu.roll(x, shift=(-dx) % P, axis=1)
        return jnp.where(not_left if dx < 0 else not_right, rolled, pad)

    def shift_v(x, dy, pad):
        # out[i, j] = x[i+dy, j] if the source stays inside the same map, else pad
        rolled = pltpu.roll(x, shift=(-dy) % Hs, axis=0)
        return jnp.where(not_top if dy < 0 else not_bot, rolled, pad)

    g = x_ref[0, 0]      # [Hs, P] wall map(s)
    goal = x_ref[0, 1]   # [Hs, P] goal map(s), values in [0, 1]

    r = goal - 1.0       # r = -(1 - goal)

    def conv3x3(x, w_ref, bias):
        # cross-correlation, zero SAME padding (matches nn.Conv2d, padding=1),
        # computed separably: 2 horizontal + 2 vertical shifts instead of 8.
        xl = shift_h(x, -1, 0.0)
        xr = shift_h(x, +1, 0.0)
        rows = [w_ref[3 * ky] * xl + w_ref[3 * ky + 1] * x + w_ref[3 * ky + 2] * xr
                for ky in range(3)]
        return (rows[1] + shift_v(rows[0], -1, 0.0) + shift_v(rows[2], +1, 0.0)
                + bias)

    # p = sigmoid(conv(relu(conv(grid))))  (vpn_double_conv path, sigmoid act)
    h_p = jnp.maximum(conv3x3(g, hp_w_ref, bias_ref[0]), 0.0)
    p = jax.nn.sigmoid(conv3x3(h_p, p_w_ref, bias_ref[1]))

    neg_inf = jnp.float32(-jnp.inf)

    def maxpool3x3(x):
        # MaxPool2d(kernel=3, stride=1, padding=1), separable 3-max.
        # Every window contains its (finite) center, so pool(v) is never -inf
        # and p*pool(v) can't produce NaN (also holds for zero dummy maps).
        hm = jnp.maximum(x, jnp.maximum(shift_h(x, -1, neg_inf),
                                        shift_h(x, +1, neg_inf)))
        return jnp.maximum(hm, jnp.maximum(shift_v(hm, -1, neg_inf),
                                           shift_v(hm, +1, neg_inf)))

    # v = max(v, r + p*(pool(v) - r)) == max(v, p*pool(v) + r*(1-p))
    q = r * (1.0 - p)

    def vi_body(_, v):
        return jnp.maximum(v, p * maxpool3x3(v) + q)

    v = lax.fori_loop(0, K_ITERS, vi_body, r, unroll=vi_unroll)

    v_ref[0] = v
    p_ref[0] = p


def mvprop_forward(X, hp_w, hp_b, p_w, p_b):
    """X: [B, 2, H, W] float32 (channel 0 = grid/walls, channel 1 = goal in [0, 1])."""
    B, C, H, W = X.shape
    assert C == 2
    X = X.astype(jnp.float32)

    # --- lane packing: always a full (>= 128-lane) slab ---------------------
    bt = pl.cdiv(128, W) if W < 128 else 1   # maps packed side-by-side in lanes
    P = bt * W                               # >= 128 (exactly 128 when W | 128)
    slabs = pl.cdiv(B, bt)                   # number of 128-lane slabs of data

    # --- slabs per grid program (amortize ~600-cycle grid-step overhead) ----
    # Rough per-slab VMEM footprint (f32): double-buffered input (2 ch) + two
    # double-buffered outputs + ~6 loop-live temporaries ~= 18 arrays of (H, P).
    per_slab_bytes = 72 * H * P
    vmem_budget = 20 * 1024 * 1024           # safe vs v7x 64 MiB / default scoped
    tb_max = max(1, vmem_budget // per_slab_bytes)
    if slabs >= 2:
        # Keep >= 2 grid programs so both v7x TensorCores get work (grid axis is
        # "parallel"), but make each program as big as VMEM allows otherwise.
        Tb = min(tb_max, pl.cdiv(slabs, 2))
    else:
        Tb = 1
    T = pl.cdiv(slabs, Tb)
    Bp = T * Tb * bt
    if Bp != B:  # pad with whole dummy maps only (keeps col%W / row%H masks valid)
        X = jnp.concatenate([X, jnp.zeros((Bp - B, C, H, W), jnp.float32)], axis=0)

    Hs = Tb * H
    # [Bp, 2, H, W] -> [T, 2, Tb*H, bt*W]:
    # per program, Tb slabs stacked along rows, bt maps per slab along lanes.
    Xp = (X.reshape(T, Tb, bt, C, H, W)
           .transpose(0, 3, 1, 4, 2, 5)
           .reshape(T, C, Hs, P))

    hp_w_flat = hp_w.reshape(9).astype(jnp.float32)
    p_w_flat = p_w.reshape(9).astype(jnp.float32)
    bias = jnp.stack([jnp.asarray(hp_b), jnp.asarray(p_b)]).astype(jnp.float32).reshape(2)

    # Full unroll for tiny tiles (<= 4 f32 vregs per array); unroll-by-5 otherwise.
    vi_unroll = True if Hs * P <= 4 * 1024 else 5

    smem_spec = pl.BlockSpec(memory_space=pltpu.MemorySpace.SMEM)
    in_spec = pl.BlockSpec((1, C, Hs, P), lambda t: (t, 0, 0, 0))
    out_spec = pl.BlockSpec((1, Hs, P), lambda t: (t, 0, 0))

    v_p, p_p = pl.pallas_call(
        functools.partial(mvprop_kernel, H=H, W=W, vi_unroll=vi_unroll),
        out_shape=(jax.ShapeDtypeStruct((T, Hs, P), jnp.float32),
                   jax.ShapeDtypeStruct((T, Hs, P), jnp.float32)),
        grid=(T,),
        in_specs=[smem_spec, smem_spec, smem_spec, in_spec],
        out_specs=(out_spec, out_spec),
        compiler_params=pltpu.CompilerParams(
            dimension_semantics=("parallel",),
            vmem_limit_bytes=32 * 1024 * 1024),
    )(hp_w_flat, p_w_flat, bias, Xp)

    def unpack(y):
        return (y.reshape(T, Tb, H, bt, W)
                 .transpose(0, 1, 3, 2, 4)
                 .reshape(Bp, H, W)[:B])

    return unpack(v_p), unpack(p_p)


def ref_forward(X, hp_w, hp_b, p_w, p_b):
    """Pure-JAX reference mirroring the PyTorch forward (NCHW)."""
    grid_map = X[:, 0:1]
    goal_map = X[:, 1:2]
    r = goal_map - 1.0
    dn = ("NCHW", "OIHW", "NCHW")
    hp = lax.conv_general_dilated(grid_map, hp_w.reshape(1, 1, 3, 3),
                                  (1, 1), "SAME", dimension_numbers=dn) + hp_b
    hp = jnp.maximum(hp, 0.0)
    p = jax.nn.sigmoid(
        lax.conv_general_dilated(hp, p_w.reshape(1, 1, 3, 3),
                                 (1, 1), "SAME", dimension_numbers=dn) + p_b)

    def pool(x):
        return lax.reduce_window(x, -jnp.inf, lax.max,
                                 (1, 1, 3, 3), (1, 1, 1, 1), "SAME")

    v = r
    for _ in range(K_ITERS):
        v = jnp.maximum(v, r + p * (pool(v) - r))
    return v[:, 0], p[:, 0]


if __name__ == "__main__":
    key = jax.random.PRNGKey(0)
    k1, k2, k3, k4, k5, k6 = jax.random.split(key, 6)
    B, H, W = 2, 16, 16

    grid_map = jax.random.uniform(k1, (B, H, W), jnp.float32)   # wall channel
    goal_map = jax.random.uniform(k2, (B, H, W), jnp.float32)   # goal in [0, 1]
    X = jnp.stack([grid_map, goal_map], axis=1)                 # [B, 2, H, W]

    # Conv2d(1, 1, 3, 3) parameters. Weights uniform(0, 0.5) as in __init__;
    # biases uniform(-1/3, 1/3) (PyTorch default for fan_in = 9).
    hp_w = jax.random.uniform(k3, (3, 3), jnp.float32, 0.0, 0.5)
    p_w = jax.random.uniform(k4, (3, 3), jnp.float32, 0.0, 0.5)
    hp_b = jax.random.uniform(k5, (), jnp.float32, -1.0 / 3.0, 1.0 / 3.0)
    p_b = jax.random.uniform(k6, (), jnp.float32, -1.0 / 3.0, 1.0 / 3.0)

    v, p = jax.block_until_ready(mvprop_forward(X, hp_w, hp_b, p_w, p_b))
    v_ref, p_ref = ref_forward(X, hp_w, hp_b, p_w, p_b)

    np.testing.assert_allclose(np.asarray(v), np.asarray(v_ref), atol=1e-4, rtol=1e-4)
    np.testing.assert_allclose(np.asarray(p), np.asarray(p_ref), atol=1e-4, rtol=1e-4)
    print("KERNEL_OK")
</pallas_src>

<mosaic_0001>
module attributes {stable_mosaic.version = 11 : i64} {
  func.func @mvprop_kernel(%arg0: i32, %arg1: memref<9xf32, #tpu.memory_space<smem>>, %arg2: memref<9xf32, #tpu.memory_space<smem>>, %arg3: memref<2xf32, #tpu.memory_space<smem>>, %arg4: memref<1x2x16x128xf32, #tpu.memory_space<vmem>>, %arg5: memref<1x16x128xf32, #tpu.memory_space<vmem>>, %arg6: memref<1x16x128xf32, #tpu.memory_space<vmem>>) attributes {dimension_semantics = [#tpu.dimension_semantics<parallel>], iteration_bounds = array<i64: 1>, scalar_prefetch = 0 : i64, scratch_operands = 0 : i64, tpu.core_type = #tpu.core_type<tc>, window_params = [{transform_indices = @transform_0, window_bounds = array<i64: 9>}, {transform_indices = @transform_1, window_bounds = array<i64: 9>}, {transform_indices = @transform_2, window_bounds = array<i64: 2>}, {transform_indices = @transform_3, window_bounds = array<i64: 1, 2, 16, 128>}, {transform_indices = @transform_4, window_bounds = array<i64: 1, 16, 128>}, {transform_indices = @transform_5, window_bounds = array<i64: 1, 16, 128>}]} {
    %0 = tpu.iota {dimensions = array<i32: 0>} : vector<16x128xi32>
    %c16_i32 = arith.constant 16 : i32
    %c0_i32 = arith.constant 0 : i32
    %1 = arith.cmpi eq, %c16_i32, %c0_i32 : i32
    %c1_i32 = arith.constant 1 : i32
    %2 = arith.select %1, %c1_i32, %c16_i32 : i32
    %3 = vector.broadcast %2 : i32 to vector<16x128xi32>
    %4 = arith.remsi %0, %3 : vector<16x128xi32>
    %c0_i32_0 = arith.constant 0 : i32
    %5 = vector.broadcast %c0_i32_0 : i32 to vector<16x128xi32>
    %6 = arith.cmpi ne, %4, %5 : vector<16x128xi32>
    %c0_i32_1 = arith.constant 0 : i32
    %7 = vector.broadcast %c0_i32_1 : i32 to vector<16x128xi32>
    %8 = arith.cmpi slt, %4, %7 : vector<16x128xi32>
    %c0_i32_2 = arith.constant 0 : i32
    %9 = arith.cmpi slt, %2, %c0_i32_2 : i32
    %10 = vector.broadcast %9 : i1 to vector<16x128xi1>
    %11 = vector.broadcast %10 : vector<16x128xi1> to vector<16x128xi1>
    %12 = arith.xori %8, %11 : vector<16x128xi1>
    %13 = arith.andi %12, %6 : vector<16x128xi1>
    %14 = vector.broadcast %2 : i32 to vector<16x128xi32>
    %15 = arith.addi %4, %14 : vector<16x128xi32>
    %16 = arith.select %13, %15, %4 : vector<16x128xi1>, vector<16x128xi32>
    %17 = tpu.iota {dimensions = array<i32: 1>} : vector<16x128xi32>
    %c16_i32_3 = arith.constant 16 : i32
    %c0_i32_4 = arith.constant 0 : i32
    %18 = arith.cmpi eq, %c16_i32_3, %c0_i32_4 : i32
    %c1_i32_5 = arith.constant 1 : i32
    %19 = arith.select %18, %c1_i32_5, %c16_i32_3 : i32
    %20 = vector.broadcast %19 : i32 to vector<16x128xi32>
    %21 = arith.remsi %17, %20 : vector<16x128xi32>
    %c0_i32_6 = arith.constant 0 : i32
    %22 = vector.broadcast %c0_i32_6 : i32 to vector<16x128xi32>
    %23 = arith.cmpi ne, %21, %22 : vector<16x128xi32>
    %c0_i32_7 = arith.constant 0 : i32
    %24 = vector.broadcast %c0_i32_7 : i32 to vector<16x128xi32>
    %25 = arith.cmpi slt, %21, %24 : vector<16x128xi32>
    %c0_i32_8 = arith.constant 0 : i32
    %26 = arith.cmpi slt, %19, %c0_i32_8 : i32
    %27 = vector.broadcast %26 : i1 to vector<16x128xi1>
    %28 = vector.broadcast %27 : vector<16x128xi1> to vector<16x128xi1>
    %29 = arith.xori %25, %28 : vector<16x128xi1>
    %30 = arith.andi %29, %23 : vector<16x128xi1>
    %31 = vector.broadcast %19 : i32 to vector<16x128xi32>
    %32 = arith.addi %21, %31 : vector<16x128xi32>
    %33 = arith.select %30, %32, %21 : vector<16x128xi1>, vector<16x128xi32>
    %c0_i32_9 = arith.constant 0 : i32
    %34 = vector.broadcast %c0_i32_9 : i32 to vector<16x128xi32>
    %35 = arith.cmpi sgt, %33, %34 : vector<16x128xi32>
    %c15_i32 = arith.constant 15 : i32
    %36 = vector.broadcast %c15_i32 : i32 to vector<16x128xi32>
    %37 = arith.cmpi slt, %33, %36 : vector<16x128xi32>
    %c0_i32_10 = arith.constant 0 : i32
    %38 = vector.broadcast %c0_i32_10 : i32 to vector<16x128xi32>
    %39 = arith.cmpi sgt, %16, %38 : vector<16x128xi32>
    %c15_i32_11 = arith.constant 15 : i32
    %40 = vector.broadcast %c15_i32_11 : i32 to vector<16x128xi32>
    %41 = arith.cmpi slt, %16, %40 : vector<16x128xi32>
    %c0 = arith.constant 0 : index
    %c0_12 = arith.constant 0 : index
    %c0_13 = arith.constant 0 : index
    %c0_14 = arith.constant 0 : index
    %42 = vector.load %arg4[%c0, %c0_12, %c0_13, %c0_14] : memref<1x2x16x128xf32, #tpu.memory_space<vmem>>, vector<1x1x16x128xf32>
    %43 = vector.shape_cast %42 : vector<1x1x16x128xf32> to vector<16x128xf32>
    %c0_15 = arith.constant 0 : index
    %c1 = arith.constant 1 : index
    %c0_16 = arith.constant 0 : index
    %c0_17 = arith.constant 0 : index
    %44 = vector.load %arg4[%c0_15, %c1, %c0_16, %c0_17] : memref<1x2x16x128xf32, #tpu.memory_space<vmem>>, vector<1x1x16x128xf32>
    %45 = vector.shape_cast %44 : vector<1x1x16x128xf32> to vector<16x128xf32>
    %cst = arith.constant 1.000000e+00 : f32
    %46 = vector.broadcast %cst : f32 to vector<16x128xf32>
    %47 = arith.subf %45, %46 : vector<16x128xf32>
    %c0_18 = arith.constant 0 : index
    %48 = memref.load %arg3[%c0_18] : memref<2xf32, #tpu.memory_space<smem>>
    %c1_i32_19 = arith.constant 1 : i32
    %49 = tpu.dynamic_rotate %43 by %c1_i32_19 dim 1 : vector<16x128xf32>, i32 -> vector<16x128xf32>
    %cst_20 = arith.constant 0.000000e+00 : f32
    %50 = vector.broadcast %cst_20 : f32 to vector<16x128xf32>
    %51 = arith.select %35, %49, %50 : vector<16x128xi1>, vector<16x128xf32>
    %c127_i32 = arith.constant 127 : i32
    %52 = tpu.dynamic_rotate %43 by %c127_i32 dim 1 : vector<16x128xf32>, i32 -> vector<16x128xf32>
    %cst_21 = arith.constant 0.000000e+00 : f32
    %53 = vector.broadcast %cst_21 : f32 to vector<16x128xf32>
    %54 = arith.select %37, %52, %53 : vector<16x128xi1>, vector<16x128xf32>
    %c0_22 = arith.constant 0 : index
    %55 = memref.load %arg1[%c0_22] : memref<9xf32, #tpu.memory_space<smem>>
    %56 = vector.broadcast %55 : f32 to vector<16x128xf32>
    %57 = arith.mulf %56, %51 : vector<16x128xf32>
    %c1_23 = arith.constant 1 : index
    %58 = memref.load %arg1[%c1_23] : memref<9xf32, #tpu.memory_space<smem>>
    %59 = vector.broadcast %58 : f32 to vector<16x128xf32>
    %60 = arith.mulf %59, %43 : vector<16x128xf32>
    %61 = arith.addf %57, %60 : vector<16x128xf32>
    %c2 = arith.constant 2 : index
    %62 = memref.load %arg1[%c2] : memref<9xf32, #tpu.memory_space<smem>>
    %63 = vector.broadcast %62 : f32 to vector<16x128xf32>
    %64 = arith.mulf %63, %54 : vector<16x128xf32>
    %65 = arith.addf %61, %64 : vector<16x128xf32>
    %c3 = arith.constant 3 : index
    %66 = memref.load %arg1[%c3] : memref<9xf32, #tpu.memory_space<smem>>
    %67 = vector.broadcast %66 : f32 to vector<16x128xf32>
    %68 = arith.mulf %67, %51 : vector<16x128xf32>
    %c4 = arith.constant 4 : index
    %69 = memref.load %arg1[%c4] : memref<9xf32, #tpu.memory_space<smem>>
    %70 = vector.broadcast %69 : f32 to vector<16x128xf32>
    %71 = arith.mulf %70, %43 : vector<16x128xf32>
    %72 = arith.addf %68, %71 : vector<16x128xf32>
    %c5 = arith.constant 5 : index
    %73 = memref.load %arg1[%c5] : memref<9xf32, #tpu.memory_space<smem>>
    %74 = vector.broadcast %73 : f32 to vector<16x128xf32>
    %75 = arith.mulf %74, %54 : vector<16x128xf32>
    %76 = arith.addf %72, %75 : vector<16x128xf32>
    %c6 = arith.constant 6 : index
    %77 = memref.load %arg1[%c6] : memref<9xf32, #tpu.memory_space<smem>>
    %78 = vector.broadcast %77 : f32 to vector<16x128xf32>
    %79 = arith.mulf %78, %51 : vector<16x128xf32>
    %c7 = arith.constant 7 : index
    %80 = memref.load %arg1[%c7] : memref<9xf32, #tpu.memory_space<smem>>
    %81 = vector.broadcast %80 : f32 to vector<16x128xf32>
    %82 = arith.mulf %81, %43 : vector<16x128xf32>
    %83 = arith.addf %79, %82 : vector<16x128xf32>
    %c8 = arith.constant 8 : index
    %84 = memref.load %arg1[%c8] : memref<9xf32, #tpu.memory_space<smem>>
    %85 = vector.broadcast %84 : f32 to vector<16x128xf32>
    %86 = arith.mulf %85, %54 : vector<16x128xf32>
    %87 = arith.addf %83, %86 : vector<16x128xf32>
    %c1_i32_24 = arith.constant 1 : i32
    %88 = tpu.dynamic_rotate %65 by %c1_i32_24 dim 0 : vector<16x128xf32>, i32 -> vector<16x128xf32>
    %cst_25 = arith.constant 0.000000e+00 : f32
    %89 = vector.broadcast %cst_25 : f32 to vector<16x128xf32>
    %90 = arith.select %39, %88, %89 : vector<16x128xi1>, vector<16x128xf32>
    %91 = arith.addf %76, %90 : vector<16x128xf32>
    %c15_i32_26 = arith.constant 15 : i32
    %92 = tpu.dynamic_rotate %87 by %c15_i32_26 dim 0 : vector<16x128xf32>, i32 -> vector<16x128xf32>
    %cst_27 = arith.constant 0.000000e+00 : f32
    %93 = vector.broadcast %cst_27 : f32 to vector<16x128xf32>
    %94 = arith.select %41, %92, %93 : vector<16x128xi1>, vector<16x128xf32>
    %95 = arith.addf %91, %94 : vector<16x128xf32>
    %96 = vector.broadcast %48 : f32 to vector<16x128xf32>
    %97 = arith.addf %95, %96 : vector<16x128xf32>
    %cst_28 = arith.constant 0.000000e+00 : f32
    %98 = vector.broadcast %cst_28 : f32 to vector<16x128xf32>
    %99 = arith.maximumf %97, %98 : vector<16x128xf32>
    %c1_29 = arith.constant 1 : index
    %100 = memref.load %arg3[%c1_29] : memref<2xf32, #tpu.memory_space<smem>>
    %c1_i32_30 = arith.constant 1 : i32
    %101 = tpu.dynamic_rotate %99 by %c1_i32_30 dim 1 : vector<16x128xf32>, i32 -> vector<16x128xf32>
    %cst_31 = arith.constant 0.000000e+00 : f32
    %102 = vector.broadcast %cst_31 : f32 to vector<16x128xf32>
    %103 = arith.select %35, %101, %102 : vector<16x128xi1>, vector<16x128xf32>
    %c127_i32_32 = arith.constant 127 : i32
    %104 = tpu.dynamic_rotate %99 by %c127_i32_32 dim 1 : vector<16x128xf32>, i32 -> vector<16x128xf32>
    %cst_33 = arith.constant 0.000000e+00 : f32
    %105 = vector.broadcast %cst_33 : f32 to vector<16x128xf32>
    %106 = arith.select %37, %104, %105 : vector<16x128xi1>, vector<16x128xf32>
    %c0_34 = arith.constant 0 : index
    %107 = memref.load %arg2[%c0_34] : memref<9xf32, #tpu.memory_space<smem>>
    %108 = vector.broadcast %107 : f32 to vector<16x128xf32>
    %109 = arith.mulf %108, %103 : vector<16x128xf32>
    %c1_35 = arith.constant 1 : index
    %110 = memref.load %arg2[%c1_35] : memref<9xf32, #tpu.memory_space<smem>>
    %111 = vector.broadcast %110 : f32 to vector<16x128xf32>
    %112 = arith.mulf %111, %99 : vector<16x128xf32>
    %113 = arith.addf %109, %112 : vector<16x128xf32>
    %c2_36 = arith.constant 2 : index
    %114 = memref.load %arg2[%c2_36] : memref<9xf32, #tpu.memory_space<smem>>
    %115 = vector.broadcast %114 : f32 to vector<16x128xf32>
    %116 = arith.mulf %115, %106 : vector<16x128xf32>
    %117 = arith.addf %113, %116 : vector<16x128xf32>
    %c3_37 = arith.constant 3 : index
    %118 = memref.load %arg2[%c3_37] : memref<9xf32, #tpu.memory_space<smem>>
    %119 = vector.broadcast %118 : f32 to vector<16x128xf32>
    %120 = arith.mulf %119, %103 : vector<16x128xf32>
    %c4_38 = arith.constant 4 : index
    %121 = memref.load %arg2[%c4_38] : memref<9xf32, #tpu.memory_space<smem>>
    %122 = vector.broadcast %121 : f32 to vector<16x128xf32>
    %123 = arith.mulf %122, %99 : vector<16x128xf32>
    %124 = arith.addf %120, %123 : vector<16x128xf32>
    %c5_39 = arith.constant 5 : index
    %125 = memref.load %arg2[%c5_39] : memref<9xf32, #tpu.memory_space<smem>>
    %126 = vector.broadcast %125 : f32 to vector<16x128xf32>
    %127 = arith.mulf %126, %106 : vector<16x128xf32>
    %128 = arith.addf %124, %127 : vector<16x128xf32>
    %c6_40 = arith.constant 6 : index
    %129 = memref.load %arg2[%c6_40] : memref<9xf32, #tpu.memory_space<smem>>
    %130 = vector.broadcast %129 : f32 to vector<16x128xf32>
    %131 = arith.mulf %130, %103 : vector<16x128xf32>
    %c7_41 = arith.constant 7 : index
    %132 = memref.load %arg2[%c7_41] : memref<9xf32, #tpu.memory_space<smem>>
    %133 = vector.broadcast %132 : f32 to vector<16x128xf32>
    %134 = arith.mulf %133, %99 : vector<16x128xf32>
    %135 = arith.addf %131, %134 : vector<16x128xf32>
    %c8_42 = arith.constant 8 : index
    %136 = memref.load %arg2[%c8_42] : memref<9xf32, #tpu.memory_space<smem>>
    %137 = vector.broadcast %136 : f32 to vector<16x128xf32>
    %138 = arith.mulf %137, %106 : vector<16x128xf32>
    %139 = arith.addf %135, %138 : vector<16x128xf32>
    %c1_i32_43 = arith.constant 1 : i32
    %140 = tpu.dynamic_rotate %117 by %c1_i32_43 dim 0 : vector<16x128xf32>, i32 -> vector<16x128xf32>
    %cst_44 = arith.constant 0.000000e+00 : f32
    %141 = vector.broadcast %cst_44 : f32 to vector<16x128xf32>
    %142 = arith.select %39, %140, %141 : vector<16x128xi1>, vector<16x128xf32>
    %143 = arith.addf %128, %142 : vector<16x128xf32>
    %c15_i32_45 = arith.constant 15 : i32
    %144 = tpu.dynamic_rotate %139 by %c15_i32_45 dim 0 : vector<16x128xf32>, i32 -> vector<16x128xf32>
    %cst_46 = arith.constant 0.000000e+00 : f32
    %145 = vector.broadcast %cst_46 : f32 to vector<16x128xf32>
    %146 = arith.select %41, %144, %145 : vector<16x128xi1>, vector<16x128xf32>
    %147 = arith.addf %143, %146 : vector<16x128xf32>
    %148 = vector.broadcast %100 : f32 to vector<16x128xf32>
    %149 = arith.addf %147, %148 : vector<16x128xf32>
    %150 = arith.negf %149 : vector<16x128xf32>
    %151 = math.exp %150 : vector<16x128xf32>
    %cst_47 = arith.constant 1.000000e+00 : f32
    %152 = vector.broadcast %cst_47 : f32 to vector<16x128xf32>
    %153 = arith.addf %152, %151 : vector<16x128xf32>
    %154 = arith.divf %152, %153 : vector<16x128xf32>
    %cst_48 = arith.constant 1.000000e+00 : f32
    %155 = vector.broadcast %cst_48 : f32 to vector<16x128xf32>
    %156 = arith.subf %155, %154 : vector<16x128xf32>
    %157 = arith.mulf %47, %156 : vector<16x128xf32>
    %cst_49 = arith.constant 0xFF800000 : f32
    %c0_i32_50 = arith.constant 0 : i32
    %c1_i32_51 = arith.constant 1 : i32
    %158 = tpu.dynamic_rotate %47 by %c1_i32_51 dim 1 : vector<16x128xf32>, i32 -> vector<16x128xf32>
    %159 = vector.broadcast %cst_49 : f32 to vector<16x128xf32>
    %160 = arith.select %35, %158, %159 : vector<16x128xi1>, vector<16x128xf32>
    %c127_i32_52 = arith.constant 127 : i32
    %161 = tpu.dynamic_rotate %47 by %c127_i32_52 dim 1 : vector<16x128xf32>, i32 -> vector<16x128xf32>
    %162 = vector.broadcast %cst_49 : f32 to vector<16x128xf32>
    %163 = arith.select %37, %161, %162 : vector<16x128xi1>, vector<16x128xf32>
    %164 = arith.maximumf %160, %163 : vector<16x128xf32>
    %165 = arith.maximumf %47, %164 : vector<16x128xf32>
    %c1_i32_53 = arith.constant 1 : i32
    %166 = tpu.dynamic_rotate %165 by %c1_i32_53 dim 0 : vector<16x128xf32>, i32 -> vector<16x128xf32>
    %167 = vector.broadcast %cst_49 : f32 to vector<16x128xf32>
    %168 = arith.select %39, %166, %167 : vector<16x128xi1>, vector<16x128xf32>
    %c15_i32_54 = arith.constant 15 : i32
    %169 = tpu.dynamic_rotate %165 by %c15_i32_54 dim 0 : vector<16x128xf32>, i32 -> vector<16x128xf32>
    %170 = vector.broadcast %cst_49 : f32 to vector<16x128xf32>
    %171 = arith.select %41, %169, %170 : vector<16x128xi1>, vector<16x128xf32>
    %172 = arith.maximumf %168, %171 : vector<16x128xf32>
    %173 = arith.maximumf %165, %172 : vector<16x128xf32>
    %174 = arith.mulf %154, %173 : vector<16x128xf32>
    %175 = arith.addf %174, %157 : vector<16x128xf32>
    %176 = arith.maximumf %47, %175 : vector<16x128xf32>
    %c1_i32_55 = arith.constant 1 : i32
    %c1_i32_56 = arith.constant 1 : i32
    %177 = tpu.dynamic_rotate %176 by %c1_i32_56 dim 1 : vector<16x128xf32>, i32 -> vector<16x128xf32>
    %178 = vector.broadcast %cst_49 : f32 to vector<16x128xf32>
    %179 = arith.select %35, %177, %178 : vector<16x128xi1>, vector<16x128xf32>
    %c127_i32_57 = arith.constant 127 : i32
    %180 = tpu.dynamic_rotate %176 by %c127_i32_57 dim 1 : vector<16x128xf32>, i32 -> vector<16x128xf32>
    %181 = vector.broadcast %cst_49 : f32 to vector<16x128xf32>
    %182 = arith.select %37, %180, %181 : vector<16x128xi1>, vector<16x128xf32>
    %183 = arith.maximumf %179, %182 : vector<16x128xf32>
    %184 = arith.maximumf %176, %183 : vector<16x128xf32>
    %c1_i32_58 = arith.constant 1 : i32
    %185 = tpu.dynamic_rotate %184 by %c1_i32_58 dim 0 : vector<16x128xf32>, i32 -> vector<16x128xf32>
    %186 = vector.broadcast %cst_49 : f32 to vector<16x128xf32>
    %187 = arith.select %39, %185, %186 : vector<16x128xi1>, vector<16x128xf32>
    %c15_i32_59 = arith.constant 15 : i32
    %188 = tpu.dynamic_rotate %184 by %c15_i32_59 dim 0 : vector<16x128xf32>, i32 -> vector<16x128xf32>
    %189 = vector.broadcast %cst_49 : f32 to vector<16x128xf32>
    %190 = arith.select %41, %188, %189 : vector<16x128xi1>, vector<16x128xf32>
    %191 = arith.maximumf %187, %190 : vector<16x128xf32>
    %192 = arith.maximumf %184, %191 : vector<16x128xf32>
    %193 = arith.mulf %154, %192 : vector<16x128xf32>
    %194 = arith.addf %193, %157 : vector<16x128xf32>
    %195 = arith.maximumf %176, %194 : vector<16x128xf32>
    %c2_i32 = arith.constant 2 : i32
    %c1_i32_60 = arith.constant 1 : i32
    %196 = tpu.dynamic_rotate %195 by %c1_i32_60 dim 1 : vector<16x128xf32>, i32 -> vector<16x128xf32>
    %197 = vector.broadcast %cst_49 : f32 to vector<16x128xf32>
    %198 = arith.select %35, %196, %197 : vector<16x128xi1>, vector<16x128xf32>
    %c127_i32_61 = arith.constant 127 : i32
    %199 = tpu.dynamic_rotate %195 by %c127_i32_61 dim 1 : vector<16x128xf32>, i32 -> vector<16x128xf32>
    %200 = vector.broadcast %cst_49 : f32 to vector<16x128xf32>
    %201 = arith.select %37, %199, %200 : vector<16x128xi1>, vector<16x128xf32>
    %202 = arith.maximumf %198, %201 : vector<16x128xf32>
    %203 = arith.maximumf %195, %202 : vector<16x128xf32>
    %c1_i32_62 = arith.constant 1 : i32
    %204 = tpu.dynamic_rotate %203 by %c1_i32_62 dim 0 : vector<16x128xf32>, i32 -> vector<16x128xf32>
    %205 = vector.broadcast %cst_49 : f32 to vector<16x128xf32>
    %206 = arith.select %39, %204, %205 : vector<16x128xi1>, vector<16x128xf32>
    %c15_i32_63 = arith.constant 15 : i32
    %207 = tpu.dynamic_rotate %203 by %c15_i32_63 dim 0 : vector<16x128xf32>, i32 -> vector<16x128xf32>
    %208 = vector.broadcast %cst_49 : f32 to vector<16x128xf32>
    %209 = arith.select %41, %207, %208 : vector<16x128xi1>, vector<16x128xf32>
    %210 = arith.maximumf %206, %209 : vector<16x128xf32>
    %211 = arith.maximumf %203, %210 : vector<16x128xf32>
    %212 = arith.mulf %154, %211 : vector<16x128xf32>
    %213 = arith.addf %212, %157 : vector<16x128xf32>
    %214 = arith.maximumf %195, %213 : vector<16x128xf32>
    %c3_i32 = arith.constant 3 : i32
    %c1_i32_64 = arith.constant 1 : i32
    %215 = tpu.dynamic_rotate %214 by %c1_i32_64 dim 1 : vector<16x128xf32>, i32 -> vector<16x128xf32>
    %216 = vector.broadcast %cst_49 : f32 to vector<16x128xf32>
    %217 = arith.select %35, %215, %216 : vector<16x128xi1>, vector<16x128xf32>
    %c127_i32_65 = arith.constant 127 : i32
    %218 = tpu.dynamic_rotate %214 by %c127_i32_65 dim 1 : vector<16x128xf32>, i32 -> vector<16x128xf32>
    %219 = vector.broadcast %cst_49 : f32 to vector<16x128xf32>
    %220 = arith.select %37, %218, %219 : vector<16x128xi1>, vector<16x128xf32>
    %221 = arith.maximumf %217, %220 : vector<16x128xf32>
    %222 = arith.maximumf %214, %221 : vector<16x128xf32>
    %c1_i32_66 = arith.constant 1 : i32
    %223 = tpu.dynamic_rotate %222 by %c1_i32_66 dim 0 : vector<16x128xf32>, i32 -> vector<16x128xf32>
    %224 = vector.broadcast %cst_49 : f32 to vector<16x128xf32>
    %225 = arith.select %39, %223, %224 : vector<16x128xi1>, vector<16x128xf32>
    %c15_i32_67 = arith.constant 15 : i32
    %226 = tpu.dynamic_rotate %222 by %c15_i32_67 dim 0 : vector<16x128xf32>, i32 -> vector<16x128xf32>
    %227 = vector.broadcast %cst_49 : f32 to vector<16x128xf32>
    %228 = arith.select %41, %226, %227 : vector<16x128xi1>, vector<16x128xf32>
    %229 = arith.maximumf %225, %228 : vector<16x128xf32>
    %230 = arith.maximumf %222, %229 : vector<16x128xf32>
    %231 = arith.mulf %154, %230 : vector<16x128xf32>
    %232 = arith.addf %231, %157 : vector<16x128xf32>
    %233 = arith.maximumf %214, %232 : vector<16x128xf32>
    %c4_i32 = arith.constant 4 : i32
    %c1_i32_68 = arith.constant 1 : i32
    %234 = tpu.dynamic_rotate %233 by %c1_i32_68 dim 1 : vector<16x128xf32>, i32 -> vector<16x128xf32>
    %235 = vector.broadcast %cst_49 : f32 to vector<16x128xf32>
    %236 = arith.select %35, %234, %235 : vector<16x128xi1>, vector<16x128xf32>
    %c127_i32_69 = arith.constant 127 : i32
    %237 = tpu.dynamic_rotate %233 by %c127_i32_69 dim 1 : vector<16x128xf32>, i32 -> vector<16x128xf32>
    %238 = vector.broadcast %cst_49 : f32 to vector<16x128xf32>
    %239 = arith.select %37, %237, %238 : vector<16x128xi1>, vector<16x128xf32>
    %240 = arith.maximumf %236, %239 : vector<16x128xf32>
    %241 = arith.maximumf %233, %240 : vector<16x128xf32>
    %c1_i32_70 = arith.constant 1 : i32
    %242 = tpu.dynamic_rotate %241 by %c1_i32_70 dim 0 : vector<16x128xf32>, i32 -> vector<16x128xf32>
    %243 = vector.broadcast %cst_49 : f32 to vector<16x128xf32>
    %244 = arith.select %39, %242, %243 : vector<16x128xi1>, vector<16x128xf32>
    %c15_i32_71 = arith.constant 15 : i32
    %245 = tpu.dynamic_rotate %241 by %c15_i32_71 dim 0 : vector<16x128xf32>, i32 -> vector<16x128xf32>
    %246 = vector.broadcast %cst_49 : f32 to vector<16x128xf32>
    %247 = arith.select %41, %245, %246 : vector<16x128xi1>, vector<16x128xf32>
    %248 = arith.maximumf %244, %247 : vector<16x128xf32>
    %249 = arith.maximumf %241, %248 : vector<16x128xf32>
    %250 = arith.mulf %154, %249 : vector<16x128xf32>
    %251 = arith.addf %250, %157 : vector<16x128xf32>
    %252 = arith.maximumf %233, %251 : vector<16x128xf32>
    %c5_i32 = arith.constant 5 : i32
    %c1_i32_72 = arith.constant 1 : i32
    %253 = tpu.dynamic_rotate %252 by %c1_i32_72 dim 1 : vector<16x128xf32>, i32 -> vector<16x128xf32>
    %254 = vector.broadcast %cst_49 : f32 to vector<16x128xf32>
    %255 = arith.select %35, %253, %254 : vector<16x128xi1>, vector<16x128xf32>
    %c127_i32_73 = arith.constant 127 : i32
    %256 = tpu.dynamic_rotate %252 by %c127_i32_73 dim 1 : vector<16x128xf32>, i32 -> vector<16x128xf32>
    %257 = vector.broadcast %cst_49 : f32 to vector<16x128xf32>
    %258 = arith.select %37, %256, %257 : vector<16x128xi1>, vector<16x128xf32>
    %259 = arith.maximumf %255, %258 : vector<16x128xf32>
    %260 = arith.maximumf %252, %259 : vector<16x128xf32>
    %c1_i32_74 = arith.constant 1 : i32
    %261 = tpu.dynamic_rotate %260 by %c1_i32_74 dim 0 : vector<16x128xf32>, i32 -> vector<16x128xf32>
    %262 = vector.broadcast %cst_49 : f32 to vector<16x128xf32>
    %263 = arith.select %39, %261, %262 : vector<16x128xi1>, vector<16x128xf32>
    %c15_i32_75 = arith.constant 15 : i32
    %264 = tpu.dynamic_rotate %260 by %c15_i32_75 dim 0 : vector<16x128xf32>, i32 -> vector<16x128xf32>
    %265 = vector.broadcast %cst_49 : f32 to vector<16x128xf32>
    %266 = arith.select %41, %264, %265 : vector<16x128xi1>, vector<16x128xf32>
    %267 = arith.maximumf %263, %266 : vector<16x128xf32>
    %268 = arith.maximumf %260, %267 : vector<16x128xf32>
    %269 = arith.mulf %154, %268 : vector<16x128xf32>
    %270 = arith.addf %269, %157 : vector<16x128xf32>
    %271 = arith.maximumf %252, %270 : vector<16x128xf32>
    %c6_i32 = arith.constant 6 : i32
    %c1_i32_76 = arith.constant 1 : i32
    %272 = tpu.dynamic_rotate %271 by %c1_i32_76 dim 1 : vector<16x128xf32>, i32 -> vector<16x128xf32>
    %273 = vector.broadcast %cst_49 : f32 to vector<16x128xf32>
    %274 = arith.select %35, %272, %273 : vector<16x128xi1>, vector<16x128xf32>
    %c127_i32_77 = arith.constant 127 : i32
    %275 = tpu.dynamic_rotate %271 by %c127_i32_77 dim 1 : vector<16x128xf32>, i32 -> vector<16x128xf32>
    %276 = vector.broadcast %cst_49 : f32 to vector<16x128xf32>
    %277 = arith.select %37, %275, %276 : vector<16x128xi1>, vector<16x128xf32>
    %278 = arith.maximumf %274, %277 : vector<16x128xf32>
    %279 = arith.maximumf %271, %278 : vector<16x128xf32>
    %c1_i32_78 = arith.constant 1 : i32
    %280 = tpu.dynamic_rotate %279 by %c1_i32_78 dim 0 : vector<16x128xf32>, i32 -> vector<16x128xf32>
    %281 = vector.broadcast %cst_49 : f32 to vector<16x128xf32>
    %282 = arith.select %39, %280, %281 : vector<16x128xi1>, vector<16x128xf32>
    %c15_i32_79 = arith.constant 15 : i32
    %283 = tpu.dynamic_rotate %279 by %c15_i32_79 dim 0 : vector<16x128xf32>, i32 -> vector<16x128xf32>
    %284 = vector.broadcast %cst_49 : f32 to vector<16x128xf32>
    %285 = arith.select %41, %283, %284 : vector<16x128xi1>, vector<16x128xf32>
    %286 = arith.maximumf %282, %285 : vector<16x128xf32>
    %287 = arith.maximumf %279, %286 : vector<16x128xf32>
    %288 = arith.mulf %154, %287 : vector<16x128xf32>
    %289 = arith.addf %288, %157 : vector<16x128xf32>
    %290 = arith.maximumf %271, %289 : vector<16x128xf32>
    %c7_i32 = arith.constant 7 : i32
    %c1_i32_80 = arith.constant 1 : i32
    %291 = tpu.dynamic_rotate %290 by %c1_i32_80 dim 1 : vector<16x128xf32>, i32 -> vector<16x128xf32>
    %292 = vector.broadcast %cst_49 : f32 to vector<16x128xf32>
    %293 = arith.select %35, %291, %292 : vector<16x128xi1>, vector<16x128xf32>
    %c127_i32_81 = arith.constant 127 : i32
    %294 = tpu.dynamic_rotate %290 by %c127_i32_81 dim 1 : vector<16x128xf32>, i32 -> vector<16x128xf32>
    %295 = vector.broadcast %cst_49 : f32 to vector<16x128xf32>
    %296 = arith.select %37, %294, %295 : vector<16x128xi1>, vector<16x128xf32>
    %297 = arith.maximumf %293, %296 : vector<16x128xf32>
    %298 = arith.maximumf %290, %297 : vector<16x128xf32>
    %c1_i32_82 = arith.constant 1 : i32
    %299 = tpu.dynamic_rotate %298 by %c1_i32_82 dim 0 : vector<16x128xf32>, i32 -> vector<16x128xf32>
    %300 = vector.broadcast %cst_49 : f32 to vector<16x128xf32>
    %301 = arith.select %39, %299, %300 : vector<16x128xi1>, vector<16x128xf32>
    %c15_i32_83 = arith.constant 15 : i32
    %302 = tpu.dynamic_rotate %298 by %c15_i32_83 dim 0 : vector<16x128xf32>, i32 -> vector<16x128xf32>
    %303 = vector.broadcast %cst_49 : f32 to vector<16x128xf32>
    %304 = arith.select %41, %302, %303 : vector<16x128xi1>, vector<16x128xf32>
    %305 = arith.maximumf %301, %304 : vector<16x128xf32>
    %306 = arith.maximumf %298, %305 : vector<16x128xf32>
    %307 = arith.mulf %154, %306 : vector<16x128xf32>
    %308 = arith.addf %307, %157 : vector<16x128xf32>
    %309 = arith.maximumf %290, %308 : vector<16x128xf32>
    %c8_i32 = arith.constant 8 : i32
    %c1_i32_84 = arith.constant 1 : i32
    %310 = tpu.dynamic_rotate %309 by %c1_i32_84 dim 1 : vector<16x128xf32>, i32 -> vector<16x128xf32>
    %311 = vector.broadcast %cst_49 : f32 to vector<16x128xf32>
    %312 = arith.select %35, %310, %311 : vector<16x128xi1>, vector<16x128xf32>
    %c127_i32_85 = arith.constant 127 : i32
    %313 = tpu.dynamic_rotate %309 by %c127_i32_85 dim 1 : vector<16x128xf32>, i32 -> vector<16x128xf32>
    %314 = vector.broadcast %cst_49 : f32 to vector<16x128xf32>
    %315 = arith.select %37, %313, %314 : vector<16x128xi1>, vector<16x128xf32>
    %316 = arith.maximumf %312, %315 : vector<16x128xf32>
    %317 = arith.maximumf %309, %316 : vector<16x128xf32>
    %c1_i32_86 = arith.constant 1 : i32
    %318 = tpu.dynamic_rotate %317 by %c1_i32_86 dim 0 : vector<16x128xf32>, i32 -> vector<16x128xf32>
    %319 = vector.broadcast %cst_49 : f32 to vector<16x128xf32>
    %320 = arith.select %39, %318, %319 : vector<16x128xi1>, vector<16x128xf32>
    %c15_i32_87 = arith.constant 15 : i32
    %321 = tpu.dynamic_rotate %317 by %c15_i32_87 dim 0 : vector<16x128xf32>, i32 -> vector<16x128xf32>
    %322 = vector.broadcast %cst_49 : f32 to vector<16x128xf32>
    %323 = arith.select %41, %321, %322 : vector<16x128xi1>, vector<16x128xf32>
    %324 = arith.maximumf %320, %323 : vector<16x128xf32>
    %325 = arith.maximumf %317, %324 : vector<16x128xf32>
    %326 = arith.mulf %154, %325 : vector<16x128xf32>
    %327 = arith.addf %326, %157 : vector<16x128xf32>
    %328 = arith.maximumf %309, %327 : vector<16x128xf32>
    %c9_i32 = arith.constant 9 : i32
    %c1_i32_88 = arith.constant 1 : i32
    %329 = tpu.dynamic_rotate %328 by %c1_i32_88 dim 1 : vector<16x128xf32>, i32 -> vector<16x128xf32>
    %330 = vector.broadcast %cst_49 : f32 to vector<16x128xf32>
    %331 = arith.select %35, %329, %330 : vector<16x128xi1>, vector<16x128xf32>
    %c127_i32_89 = arith.constant 127 : i32
    %332 = tpu.dynamic_rotate %328 by %c127_i32_89 dim 1 : vector<16x128xf32>, i32 -> vector<16x128xf32>
    %333 = vector.broadcast %cst_49 : f32 to vector<16x128xf32>
    %334 = arith.select %37, %332, %333 : vector<16x128xi1>, vector<16x128xf32>
    %335 = arith.maximumf %331, %334 : vector<16x128xf32>
    %336 = arith.maximumf %328, %335 : vector<16x128xf32>
    %c1_i32_90 = arith.constant 1 : i32
    %337 = tpu.dynamic_rotate %336 by %c1_i32_90 dim 0 : vector<16x128xf32>, i32 -> vector<16x128xf32>
    %338 = vector.broadcast %cst_49 : f32 to vector<16x128xf32>
    %339 = arith.select %39, %337, %338 : vector<16x128xi1>, vector<16x128xf32>
    %c15_i32_91 = arith.constant 15 : i32
    %340 = tpu.dynamic_rotate %336 by %c15_i32_91 dim 0 : vector<16x128xf32>, i32 -> vector<16x128xf32>
    %341 = vector.broadcast %cst_49 : f32 to vector<16x128xf32>
    %342 = arith.select %41, %340, %341 : vector<16x128xi1>, vector<16x128xf32>
    %343 = arith.maximumf %339, %342 : vector<16x128xf32>
    %344 = arith.maximumf %336, %343 : vector<16x128xf32>
    %345 = arith.mulf %154, %344 : vector<16x128xf32>
    %346 = arith.addf %345, %157 : vector<16x128xf32>
    %347 = arith.maximumf %328, %346 : vector<16x128xf32>
    %c10_i32 = arith.constant 10 : i32
    %c1_i32_92 = arith.constant 1 : i32
    %348 = tpu.dynamic_rotate %347 by %c1_i32_92 dim 1 : vector<16x128xf32>, i32 -> vector<16x128xf32>
    %349 = vector.broadcast %cst_49 : f32 to vector<16x128xf32>
    %350 = arith.select %35, %348, %349 : vector<16x128xi1>, vector<16x128xf32>
    %c127_i32_93 = arith.constant 127 : i32
    %351 = tpu.dynamic_rotate %347 by %c127_i32_93 dim 1 : vector<16x128xf32>, i32 -> vector<16x128xf32>
    %352 = vector.broadcast %cst_49 : f32 to vector<16x128xf32>
    %353 = arith.select %37, %351, %352 : vector<16x128xi1>, vector<16x128xf32>
    %354 = arith.maximumf %350, %353 : vector<16x128xf32>
    %355 = arith.maximumf %347, %354 : vector<16x128xf32>
    %c1_i32_94 = arith.constant 1 : i32
    %356 = tpu.dynamic_rotate %355 by %c1_i32_94 dim 0 : vector<16x128xf32>, i32 -> vector<16x128xf32>
    %357 = vector.broadcast %cst_49 : f32 to vector<16x128xf32>
    %358 = arith.select %39, %356, %357 : vector<16x128xi1>, vector<16x128xf32>
    %c15_i32_95 = arith.constant 15 : i32
    %359 = tpu.dynamic_rotate %355 by %c15_i32_95 dim 0 : vector<16x128xf32>, i32 -> vector<16x128xf32>
    %360 = vector.broadcast %cst_49 : f32 to vector<16x128xf32>
    %361 = arith.select %41, %359, %360 : vector<16x128xi1>, vector<16x128xf32>
    %362 = arith.maximumf %358, %361 : vector<16x128xf32>
    %363 = arith.maximumf %355, %362 : vector<16x128xf32>
    %364 = arith.mulf %154, %363 : vector<16x128xf32>
    %365 = arith.addf %364, %157 : vector<16x128xf32>
    %366 = arith.maximumf %347, %365 : vector<16x128xf32>
    %c11_i32 = arith.constant 11 : i32
    %c1_i32_96 = arith.constant 1 : i32
    %367 = tpu.dynamic_rotate %366 by %c1_i32_96 dim 1 : vector<16x128xf32>, i32 -> vector<16x128xf32>
    %368 = vector.broadcast %cst_49 : f32 to vector<16x128xf32>
    %369 = arith.select %35, %367, %368 : vector<16x128xi1>, vector<16x128xf32>
    %c127_i32_97 = arith.constant 127 : i32
    %370 = tpu.dynamic_rotate %366 by %c127_i32_97 dim 1 : vector<16x128xf32>, i32 -> vector<16x128xf32>
    %371 = vector.broadcast %cst_49 : f32 to vector<16x128xf32>
    %372 = arith.select %37, %370, %371 : vector<16x128xi1>, vector<16x128xf32>
    %373 = arith.maximumf %369, %372 : vector<16x128xf32>
    %374 = arith.maximumf %366, %373 : vector<16x128xf32>
    %c1_i32_98 = arith.constant 1 : i32
    %375 = tpu.dynamic_rotate %374 by %c1_i32_98 dim 0 : vector<16x128xf32>, i32 -> vector<16x128xf32>
    %376 = vector.broadcast %cst_49 : f32 to vector<16x128xf32>
    %377 = arith.select %39, %375, %376 : vector<16x128xi1>, vector<16x128xf32>
    %c15_i32_99 = arith.constant 15 : i32
    %378 = tpu.dynamic_rotate %374 by %c15_i32_99 dim 0 : vector<16x128xf32>, i32 -> vector<16x128xf32>
    %379 = vector.broadcast %cst_49 : f32 to vector<16x128xf32>
    %380 = arith.select %41, %378, %379 : vector<16x128xi1>, vector<16x128xf32>
    %381 = arith.maximumf %377, %380 : vector<16x128xf32>
    %382 = arith.maximumf %374, %381 : vector<16x128xf32>
    %383 = arith.mulf %154, %382 : vector<16x128xf32>
    %384 = arith.addf %383, %157 : vector<16x128xf32>
    %385 = arith.maximumf %366, %384 : vector<16x128xf32>
    %c12_i32 = arith.constant 12 : i32
    %c1_i32_100 = arith.constant 1 : i32
    %386 = tpu.dynamic_rotate %385 by %c1_i32_100 dim 1 : vector<16x128xf32>, i32 -> vector<16x128xf32>
    %387 = vector.broadcast %cst_49 : f32 to vector<16x128xf32>
    %388 = arith.select %35, %386, %387 : vector<16x128xi1>, vector<16x128xf32>
    %c127_i32_101 = arith.constant 127 : i32
    %389 = tpu.dynamic_rotate %385 by %c127_i32_101 dim 1 : vector<16x128xf32>, i32 -> vector<16x128xf32>
    %390 = vector.broadcast %cst_49 : f32 to vector<16x128xf32>
    %391 = arith.select %37, %389, %390 : vector<16x128xi1>, vector<16x128xf32>
    %392 = arith.maximumf %388, %391 : vector<16x128xf32>
    %393 = arith.maximumf %385, %392 : vector<16x128xf32>
    %c1_i32_102 = arith.constant 1 : i32
    %394 = tpu.dynamic_rotate %393 by %c1_i32_102 dim 0 : vector<16x128xf32>, i32 -> vector<16x128xf32>
    %395 = vector.broadcast %cst_49 : f32 to vector<16x128xf32>
    %396 = arith.select %39, %394, %395 : vector<16x128xi1>, vector<16x128xf32>
    %c15_i32_103 = arith.constant 15 : i32
    %397 = tpu.dynamic_rotate %393 by %c15_i32_103 dim 0 : vector<16x128xf32>, i32 -> vector<16x128xf32>
    %398 = vector.broadcast %cst_49 : f32 to vector<16x128xf32>
    %399 = arith.select %41, %397, %398 : vector<16x128xi1>, vector<16x128xf32>
    %400 = arith.maximumf %396, %399 : vector<16x128xf32>
    %401 = arith.maximumf %393, %400 : vector<16x128xf32>
    %402 = arith.mulf %154, %401 : vector<16x128xf32>
    %403 = arith.addf %402, %157 : vector<16x128xf32>
    %404 = arith.maximumf %385, %403 : vector<16x128xf32>
    %c13_i32 = arith.constant 13 : i32
    %c1_i32_104 = arith.constant 1 : i32
    %405 = tpu.dynamic_rotate %404 by %c1_i32_104 dim 1 : vector<16x128xf32>, i32 -> vector<16x128xf32>
    %406 = vector.broadcast %cst_49 : f32 to vector<16x128xf32>
    %407 = arith.select %35, %405, %406 : vector<16x128xi1>, vector<16x128xf32>
    %c127_i32_105 = arith.constant 127 : i32
    %408 = tpu.dynamic_rotate %404 by %c127_i32_105 dim 1 : vector<16x128xf32>, i32 -> vector<16x128xf32>
    %409 = vector.broadcast %cst_49 : f32 to vector<16x128xf32>
    %410 = arith.select %37, %408, %409 : vector<16x128xi1>, vector<16x128xf32>
    %411 = arith.maximumf %407, %410 : vector<16x128xf32>
    %412 = arith.maximumf %404, %411 : vector<16x128xf32>
    %c1_i32_106 = arith.constant 1 : i32
    %413 = tpu.dynamic_rotate %412 by %c1_i32_106 dim 0 : vector<16x128xf32>, i32 -> vector<16x128xf32>
    %414 = vector.broadcast %cst_49 : f32 to vector<16x128xf32>
    %415 = arith.select %39, %413, %414 : vector<16x128xi1>, vector<16x128xf32>
    %c15_i32_107 = arith.constant 15 : i32
    %416 = tpu.dynamic_rotate %412 by %c15_i32_107 dim 0 : vector<16x128xf32>, i32 -> vector<16x128xf32>
    %417 = vector.broadcast %cst_49 : f32 to vector<16x128xf32>
    %418 = arith.select %41, %416, %417 : vector<16x128xi1>, vector<16x128xf32>
    %419 = arith.maximumf %415, %418 : vector<16x128xf32>
    %420 = arith.maximumf %412, %419 : vector<16x128xf32>
    %421 = arith.mulf %154, %420 : vector<16x128xf32>
    %422 = arith.addf %421, %157 : vector<16x128xf32>
    %423 = arith.maximumf %404, %422 : vector<16x128xf32>
    %c14_i32 = arith.constant 14 : i32
    %c1_i32_108 = arith.constant 1 : i32
    %424 = tpu.dynamic_rotate %423 by %c1_i32_108 dim 1 : vector<16x128xf32>, i32 -> vector<16x128xf32>
    %425 = vector.broadcast %cst_49 : f32 to vector<16x128xf32>
    %426 = arith.select %35, %424, %425 : vector<16x128xi1>, vector<16x128xf32>
    %c127_i32_109 = arith.constant 127 : i32
    %427 = tpu.dynamic_rotate %423 by %c127_i32_109 dim 1 : vector<16x128xf32>, i32 -> vector<16x128xf32>
    %428 = vector.broadcast %cst_49 : f32 to vector<16x128xf32>
    %429 = arith.select %37, %427, %428 : vector<16x128xi1>, vector<16x128xf32>
    %430 = arith.maximumf %426, %429 : vector<16x128xf32>
    %431 = arith.maximumf %423, %430 : vector<16x128xf32>
    %c1_i32_110 = arith.constant 1 : i32
    %432 = tpu.dynamic_rotate %431 by %c1_i32_110 dim 0 : vector<16x128xf32>, i32 -> vector<16x128xf32>
    %433 = vector.broadcast %cst_49 : f32 to vector<16x128xf32>
    %434 = arith.select %39, %432, %433 : vector<16x128xi1>, vector<16x128xf32>
    %c15_i32_111 = arith.constant 15 : i32
    %435 = tpu.dynamic_rotate %431 by %c15_i32_111 dim 0 : vector<16x128xf32>, i32 -> vector<16x128xf32>
    %436 = vector.broadcast %cst_49 : f32 to vector<16x128xf32>
    %437 = arith.select %41, %435, %436 : vector<16x128xi1>, vector<16x128xf32>
    %438 = arith.maximumf %434, %437 : vector<16x128xf32>
    %439 = arith.maximumf %431, %438 : vector<16x128xf32>
    %440 = arith.mulf %154, %439 : vector<16x128xf32>
    %441 = arith.addf %440, %157 : vector<16x128xf32>
    %442 = arith.maximumf %423, %441 : vector<16x128xf32>
    %c15_i32_112 = arith.constant 15 : i32
    %c1_i32_113 = arith.constant 1 : i32
    %443 = tpu.dynamic_rotate %442 by %c1_i32_113 dim 1 : vector<16x128xf32>, i32 -> vector<16x128xf32>
    %444 = vector.broadcast %cst_49 : f32 to vector<16x128xf32>
    %445 = arith.select %35, %443, %444 : vector<16x128xi1>, vector<16x128xf32>
    %c127_i32_114 = arith.constant 127 : i32
    %446 = tpu.dynamic_rotate %442 by %c127_i32_114 dim 1 : vector<16x128xf32>, i32 -> vector<16x128xf32>
    %447 = vector.broadcast %cst_49 : f32 to vector<16x128xf32>
    %448 = arith.select %37, %446, %447 : vector<16x128xi1>, vector<16x128xf32>
    %449 = arith.maximumf %445, %448 : vector<16x128xf32>
    %450 = arith.maximumf %442, %449 : vector<16x128xf32>
    %c1_i32_115 = arith.constant 1 : i32
    %451 = tpu.dynamic_rotate %450 by %c1_i32_115 dim 0 : vector<16x128xf32>, i32 -> vector<16x128xf32>
    %452 = vector.broadcast %cst_49 : f32 to vector<16x128xf32>
    %453 = arith.select %39, %451, %452 : vector<16x128xi1>, vector<16x128xf32>
    %c15_i32_116 = arith.constant 15 : i32
    %454 = tpu.dynamic_rotate %450 by %c15_i32_116 dim 0 : vector<16x128xf32>, i32 -> vector<16x128xf32>
    %455 = vector.broadcast %cst_49 : f32 to vector<16x128xf32>
    %456 = arith.select %41, %454, %455 : vector<16x128xi1>, vector<16x128xf32>
    %457 = arith.maximumf %453, %456 : vector<16x128xf32>
    %458 = arith.maximumf %450, %457 : vector<16x128xf32>
    %459 = arith.mulf %154, %458 : vector<16x128xf32>
    %460 = arith.addf %459, %157 : vector<16x128xf32>
    %461 = arith.maximumf %442, %460 : vector<16x128xf32>
    %c16_i32_117 = arith.constant 16 : i32
    %c1_i32_118 = arith.constant 1 : i32
    %462 = tpu.dynamic_rotate %461 by %c1_i32_118 dim 1 : vector<16x128xf32>, i32 -> vector<16x128xf32>
    %463 = vector.broadcast %cst_49 : f32 to vector<16x128xf32>
    %464 = arith.select %35, %462, %463 : vector<16x128xi1>, vector<16x128xf32>
    %c127_i32_119 = arith.constant 127 : i32
    %465 = tpu.dynamic_rotate %461 by %c127_i32_119 dim 1 : vector<16x128xf32>, i32 -> vector<16x128xf32>
    %466 = vector.broadcast %cst_49 : f32 to vector<16x128xf32>
    %467 = arith.select %37, %465, %466 : vector<16x128xi1>, vector<16x128xf32>
    %468 = arith.maximumf %464, %467 : vector<16x128xf32>
    %469 = arith.maximumf %461, %468 : vector<16x128xf32>
    %c1_i32_120 = arith.constant 1 : i32
    %470 = tpu.dynamic_rotate %469 by %c1_i32_120 dim 0 : vector<16x128xf32>, i32 -> vector<16x128xf32>
    %471 = vector.broadcast %cst_49 : f32 to vector<16x128xf32>
    %472 = arith.select %39, %470, %471 : vector<16x128xi1>, vector<16x128xf32>
    %c15_i32_121 = arith.constant 15 : i32
    %473 = tpu.dynamic_rotate %469 by %c15_i32_121 dim 0 : vector<16x128xf32>, i32 -> vector<16x128xf32>
    %474 = vector.broadcast %cst_49 : f32 to vector<16x128xf32>
    %475 = arith.select %41, %473, %474 : vector<16x128xi1>, vector<16x128xf32>
    %476 = arith.maximumf %472, %475 : vector<16x128xf32>
    %477 = arith.maximumf %469, %476 : vector<16x128xf32>
    %478 = arith.mulf %154, %477 : vector<16x128xf32>
    %479 = arith.addf %478, %157 : vector<16x128xf32>
    %480 = arith.maximumf %461, %479 : vector<16x128xf32>
    %c17_i32 = arith.constant 17 : i32
    %c1_i32_122 = arith.constant 1 : i32
    %481 = tpu.dynamic_rotate %480 by %c1_i32_122 dim 1 : vector<16x128xf32>, i32 -> vector<16x128xf32>
    %482 = vector.broadcast %cst_49 : f32 to vector<16x128xf32>
    %483 = arith.select %35, %481, %482 : vector<16x128xi1>, vector<16x128xf32>
    %c127_i32_123 = arith.constant 127 : i32
    %484 = tpu.dynamic_rotate %480 by %c127_i32_123 dim 1 : vector<16x128xf32>, i32 -> vector<16x128xf32>
    %485 = vector.broadcast %cst_49 : f32 to vector<16x128xf32>
    %486 = arith.select %37, %484, %485 : vector<16x128xi1>, vector<16x128xf32>
    %487 = arith.maximumf %483, %486 : vector<16x128xf32>
    %488 = arith.maximumf %480, %487 : vector<16x128xf32>
    %c1_i32_124 = arith.constant 1 : i32
    %489 = tpu.dynamic_rotate %488 by %c1_i32_124 dim 0 : vector<16x128xf32>, i32 -> vector<16x128xf32>
    %490 = vector.broadcast %cst_49 : f32 to vector<16x128xf32>
    %491 = arith.select %39, %489, %490 : vector<16x128xi1>, vector<16x128xf32>
    %c15_i32_125 = arith.constant 15 : i32
    %492 = tpu.dynamic_rotate %488 by %c15_i32_125 dim 0 : vector<16x128xf32>, i32 -> vector<16x128xf32>
    %493 = vector.broadcast %cst_49 : f32 to vector<16x128xf32>
    %494 = arith.select %41, %492, %493 : vector<16x128xi1>, vector<16x128xf32>
    %495 = arith.maximumf %491, %494 : vector<16x128xf32>
    %496 = arith.maximumf %488, %495 : vector<16x128xf32>
    %497 = arith.mulf %154, %496 : vector<16x128xf32>
    %498 = arith.addf %497, %157 : vector<16x128xf32>
    %499 = arith.maximumf %480, %498 : vector<16x128xf32>
    %c18_i32 = arith.constant 18 : i32
    %c1_i32_126 = arith.constant 1 : i32
    %500 = tpu.dynamic_rotate %499 by %c1_i32_126 dim 1 : vector<16x128xf32>, i32 -> vector<16x128xf32>
    %501 = vector.broadcast %cst_49 : f32 to vector<16x128xf32>
    %502 = arith.select %35, %500, %501 : vector<16x128xi1>, vector<16x128xf32>
    %c127_i32_127 = arith.constant 127 : i32
    %503 = tpu.dynamic_rotate %499 by %c127_i32_127 dim 1 : vector<16x128xf32>, i32 -> vector<16x128xf32>
    %504 = vector.broadcast %cst_49 : f32 to vector<16x128xf32>
    %505 = arith.select %37, %503, %504 : vector<16x128xi1>, vector<16x128xf32>
    %506 = arith.maximumf %502, %505 : vector<16x128xf32>
    %507 = arith.maximumf %499, %506 : vector<16x128xf32>
    %c1_i32_128 = arith.constant 1 : i32
    %508 = tpu.dynamic_rotate %507 by %c1_i32_128 dim 0 : vector<16x128xf32>, i32 -> vector<16x128xf32>
    %509 = vector.broadcast %cst_49 : f32 to vector<16x128xf32>
    %510 = arith.select %39, %508, %509 : vector<16x128xi1>, vector<16x128xf32>
    %c15_i32_129 = arith.constant 15 : i32
    %511 = tpu.dynamic_rotate %507 by %c15_i32_129 dim 0 : vector<16x128xf32>, i32 -> vector<16x128xf32>
    %512 = vector.broadcast %cst_49 : f32 to vector<16x128xf32>
    %513 = arith.select %41, %511, %512 : vector<16x128xi1>, vector<16x128xf32>
    %514 = arith.maximumf %510, %513 : vector<16x128xf32>
    %515 = arith.maximumf %507, %514 : vector<16x128xf32>
    %516 = arith.mulf %154, %515 : vector<16x128xf32>
    %517 = arith.addf %516, %157 : vector<16x128xf32>
    %518 = arith.maximumf %499, %517 : vector<16x128xf32>
    %c19_i32 = arith.constant 19 : i32
    %c1_i32_130 = arith.constant 1 : i32
    %519 = tpu.dynamic_rotate %518 by %c1_i32_130 dim 1 : vector<16x128xf32>, i32 -> vector<16x128xf32>
    %520 = vector.broadcast %cst_49 : f32 to vector<16x128xf32>
    %521 = arith.select %35, %519, %520 : vector<16x128xi1>, vector<16x128xf32>
    %c127_i32_131 = arith.constant 127 : i32
    %522 = tpu.dynamic_rotate %518 by %c127_i32_131 dim 1 : vector<16x128xf32>, i32 -> vector<16x128xf32>
    %523 = vector.broadcast %cst_49 : f32 to vector<16x128xf32>
    %524 = arith.select %37, %522, %523 : vector<16x128xi1>, vector<16x128xf32>
    %525 = arith.maximumf %521, %524 : vector<16x128xf32>
    %526 = arith.maximumf %518, %525 : vector<16x128xf32>
    %c1_i32_132 = arith.constant 1 : i32
    %527 = tpu.dynamic_rotate %526 by %c1_i32_132 dim 0 : vector<16x128xf32>, i32 -> vector<16x128xf32>
    %528 = vector.broadcast %cst_49 : f32 to vector<16x128xf32>
    %529 = arith.select %39, %527, %528 : vector<16x128xi1>, vector<16x128xf32>
    %c15_i32_133 = arith.constant 15 : i32
    %530 = tpu.dynamic_rotate %526 by %c15_i32_133 dim 0 : vector<16x128xf32>, i32 -> vector<16x128xf32>
    %531 = vector.broadcast %cst_49 : f32 to vector<16x128xf32>
    %532 = arith.select %41, %530, %531 : vector<16x128xi1>, vector<16x128xf32>
    %533 = arith.maximumf %529, %532 : vector<16x128xf32>
    %534 = arith.maximumf %526, %533 : vector<16x128xf32>
    %535 = arith.mulf %154, %534 : vector<16x128xf32>
    %536 = arith.addf %535, %157 : vector<16x128xf32>
    %537 = arith.maximumf %518, %536 : vector<16x128xf32>
    %c20_i32 = arith.constant 20 : i32
    %c1_i32_134 = arith.constant 1 : i32
    %538 = tpu.dynamic_rotate %537 by %c1_i32_134 dim 1 : vector<16x128xf32>, i32 -> vector<16x128xf32>
    %539 = vector.broadcast %cst_49 : f32 to vector<16x128xf32>
    %540 = arith.select %35, %538, %539 : vector<16x128xi1>, vector<16x128xf32>
    %c127_i32_135 = arith.constant 127 : i32
    %541 = tpu.dynamic_rotate %537 by %c127_i32_135 dim 1 : vector<16x128xf32>, i32 -> vector<16x128xf32>
    %542 = vector.broadcast %cst_49 : f32 to vector<16x128xf32>
    %543 = arith.select %37, %541, %542 : vector<16x128xi1>, vector<16x128xf32>
    %544 = arith.maximumf %540, %543 : vector<16x128xf32>
    %545 = arith.maximumf %537, %544 : vector<16x128xf32>
    %c1_i32_136 = arith.constant 1 : i32
    %546 = tpu.dynamic_rotate %545 by %c1_i32_136 dim 0 : vector<16x128xf32>, i32 -> vector<16x128xf32>
    %547 = vector.broadcast %cst_49 : f32 to vector<16x128xf32>
    %548 = arith.select %39, %546, %547 : vector<16x128xi1>, vector<16x128xf32>
    %c15_i32_137 = arith.constant 15 : i32
    %549 = tpu.dynamic_rotate %545 by %c15_i32_137 dim 0 : vector<16x128xf32>, i32 -> vector<16x128xf32>
    %550 = vector.broadcast %cst_49 : f32 to vector<16x128xf32>
    %551 = arith.select %41, %549, %550 : vector<16x128xi1>, vector<16x128xf32>
    %552 = arith.maximumf %548, %551 : vector<16x128xf32>
    %553 = arith.maximumf %545, %552 : vector<16x128xf32>
    %554 = arith.mulf %154, %553 : vector<16x128xf32>
    %555 = arith.addf %554, %157 : vector<16x128xf32>
    %556 = arith.maximumf %537, %555 : vector<16x128xf32>
    %c21_i32 = arith.constant 21 : i32
    %c1_i32_138 = arith.constant 1 : i32
    %557 = tpu.dynamic_rotate %556 by %c1_i32_138 dim 1 : vector<16x128xf32>, i32 -> vector<16x128xf32>
    %558 = vector.broadcast %cst_49 : f32 to vector<16x128xf32>
    %559 = arith.select %35, %557, %558 : vector<16x128xi1>, vector<16x128xf32>
    %c127_i32_139 = arith.constant 127 : i32
    %560 = tpu.dynamic_rotate %556 by %c127_i32_139 dim 1 : vector<16x128xf32>, i32 -> vector<16x128xf32>
    %561 = vector.broadcast %cst_49 : f32 to vector<16x128xf32>
    %562 = arith.select %37, %560, %561 : vector<16x128xi1>, vector<16x128xf32>
    %563 = arith.maximumf %559, %562 : vector<16x128xf32>
    %564 = arith.maximumf %556, %563 : vector<16x128xf32>
    %c1_i32_140 = arith.constant 1 : i32
    %565 = tpu.dynamic_rotate %564 by %c1_i32_140 dim 0 : vector<16x128xf32>, i32 -> vector<16x128xf32>
    %566 = vector.broadcast %cst_49 : f32 to vector<16x128xf32>
    %567 = arith.select %39, %565, %566 : vector<16x128xi1>, vector<16x128xf32>
    %c15_i32_141 = arith.constant 15 : i32
    %568 = tpu.dynamic_rotate %564 by %c15_i32_141 dim 0 : vector<16x128xf32>, i32 -> vector<16x128xf32>
    %569 = vector.broadcast %cst_49 : f32 to vector<16x128xf32>
    %570 = arith.select %41, %568, %569 : vector<16x128xi1>, vector<16x128xf32>
    %571 = arith.maximumf %567, %570 : vector<16x128xf32>
    %572 = arith.maximumf %564, %571 : vector<16x128xf32>
    %573 = arith.mulf %154, %572 : vector<16x128xf32>
    %574 = arith.addf %573, %157 : vector<16x128xf32>
    %575 = arith.maximumf %556, %574 : vector<16x128xf32>
    %c22_i32 = arith.constant 22 : i32
    %c1_i32_142 = arith.constant 1 : i32
    %576 = tpu.dynamic_rotate %575 by %c1_i32_142 dim 1 : vector<16x128xf32>, i32 -> vector<16x128xf32>
    %577 = vector.broadcast %cst_49 : f32 to vector<16x128xf32>
    %578 = arith.select %35, %576, %577 : vector<16x128xi1>, vector<16x128xf32>
    %c127_i32_143 = arith.constant 127 : i32
    %579 = tpu.dynamic_rotate %575 by %c127_i32_143 dim 1 : vector<16x128xf32>, i32 -> vector<16x128xf32>
    %580 = vector.broadcast %cst_49 : f32 to vector<16x128xf32>
    %581 = arith.select %37, %579, %580 : vector<16x128xi1>, vector<16x128xf32>
    %582 = arith.maximumf %578, %581 : vector<16x128xf32>
    %583 = arith.maximumf %575, %582 : vector<16x128xf32>
    %c1_i32_144 = arith.constant 1 : i32
    %584 = tpu.dynamic_rotate %583 by %c1_i32_144 dim 0 : vector<16x128xf32>, i32 -> vector<16x128xf32>
    %585 = vector.broadcast %cst_49 : f32 to vector<16x128xf32>
    %586 = arith.select %39, %584, %585 : vector<16x128xi1>, vector<16x128xf32>
    %c15_i32_145 = arith.constant 15 : i32
    %587 = tpu.dynamic_rotate %583 by %c15_i32_145 dim 0 : vector<16x128xf32>, i32 -> vector<16x128xf32>
    %588 = vector.broadcast %cst_49 : f32 to vector<16x128xf32>
    %589 = arith.select %41, %587, %588 : vector<16x128xi1>, vector<16x128xf32>
    %590 = arith.maximumf %586, %589 : vector<16x128xf32>
    %591 = arith.maximumf %583, %590 : vector<16x128xf32>
    %592 = arith.mulf %154, %591 : vector<16x128xf32>
    %593 = arith.addf %592, %157 : vector<16x128xf32>
    %594 = arith.maximumf %575, %593 : vector<16x128xf32>
    %c23_i32 = arith.constant 23 : i32
    %c1_i32_146 = arith.constant 1 : i32
    %595 = tpu.dynamic_rotate %594 by %c1_i32_146 dim 1 : vector<16x128xf32>, i32 -> vector<16x128xf32>
    %596 = vector.broadcast %cst_49 : f32 to vector<16x128xf32>
    %597 = arith.select %35, %595, %596 : vector<16x128xi1>, vector<16x128xf32>
    %c127_i32_147 = arith.constant 127 : i32
    %598 = tpu.dynamic_rotate %594 by %c127_i32_147 dim 1 : vector<16x128xf32>, i32 -> vector<16x128xf32>
    %599 = vector.broadcast %cst_49 : f32 to vector<16x128xf32>
    %600 = arith.select %37, %598, %599 : vector<16x128xi1>, vector<16x128xf32>
    %601 = arith.maximumf %597, %600 : vector<16x128xf32>
    %602 = arith.maximumf %594, %601 : vector<16x128xf32>
    %c1_i32_148 = arith.constant 1 : i32
    %603 = tpu.dynamic_rotate %602 by %c1_i32_148 dim 0 : vector<16x128xf32>, i32 -> vector<16x128xf32>
    %604 = vector.broadcast %cst_49 : f32 to vector<16x128xf32>
    %605 = arith.select %39, %603, %604 : vector<16x128xi1>, vector<16x128xf32>
    %c15_i32_149 = arith.constant 15 : i32
    %606 = tpu.dynamic_rotate %602 by %c15_i32_149 dim 0 : vector<16x128xf32>, i32 -> vector<16x128xf32>
    %607 = vector.broadcast %cst_49 : f32 to vector<16x128xf32>
    %608 = arith.select %41, %606, %607 : vector<16x128xi1>, vector<16x128xf32>
    %609 = arith.maximumf %605, %608 : vector<16x128xf32>
    %610 = arith.maximumf %602, %609 : vector<16x128xf32>
    %611 = arith.mulf %154, %610 : vector<16x128xf32>
    %612 = arith.addf %611, %157 : vector<16x128xf32>
    %613 = arith.maximumf %594, %612 : vector<16x128xf32>
    %c24_i32 = arith.constant 24 : i32
    %c1_i32_150 = arith.constant 1 : i32
    %614 = tpu.dynamic_rotate %613 by %c1_i32_150 dim 1 : vector<16x128xf32>, i32 -> vector<16x128xf32>
    %615 = vector.broadcast %cst_49 : f32 to vector<16x128xf32>
    %616 = arith.select %35, %614, %615 : vector<16x128xi1>, vector<16x128xf32>
    %c127_i32_151 = arith.constant 127 : i32
    %617 = tpu.dynamic_rotate %613 by %c127_i32_151 dim 1 : vector<16x128xf32>, i32 -> vector<16x128xf32>
    %618 = vector.broadcast %cst_49 : f32 to vector<16x128xf32>
    %619 = arith.select %37, %617, %618 : vector<16x128xi1>, vector<16x128xf32>
    %620 = arith.maximumf %616, %619 : vector<16x128xf32>
    %621 = arith.maximumf %613, %620 : vector<16x128xf32>
    %c1_i32_152 = arith.constant 1 : i32
    %622 = tpu.dynamic_rotate %621 by %c1_i32_152 dim 0 : vector<16x128xf32>, i32 -> vector<16x128xf32>
    %623 = vector.broadcast %cst_49 : f32 to vector<16x128xf32>
    %624 = arith.select %39, %622, %623 : vector<16x128xi1>, vector<16x128xf32>
    %c15_i32_153 = arith.constant 15 : i32
    %625 = tpu.dynamic_rotate %621 by %c15_i32_153 dim 0 : vector<16x128xf32>, i32 -> vector<16x128xf32>
    %626 = vector.broadcast %cst_49 : f32 to vector<16x128xf32>
    %627 = arith.select %41, %625, %626 : vector<16x128xi1>, vector<16x128xf32>
    %628 = arith.maximumf %624, %627 : vector<16x128xf32>
    %629 = arith.maximumf %621, %628 : vector<16x128xf32>
    %630 = arith.mulf %154, %629 : vector<16x128xf32>
    %631 = arith.addf %630, %157 : vector<16x128xf32>
    %632 = arith.maximumf %613, %631 : vector<16x128xf32>
    %c25_i32 = arith.constant 25 : i32
    %c1_i32_154 = arith.constant 1 : i32
    %633 = tpu.dynamic_rotate %632 by %c1_i32_154 dim 1 : vector<16x128xf32>, i32 -> vector<16x128xf32>
    %634 = vector.broadcast %cst_49 : f32 to vector<16x128xf32>
    %635 = arith.select %35, %633, %634 : vector<16x128xi1>, vector<16x128xf32>
    %c127_i32_155 = arith.constant 127 : i32
    %636 = tpu.dynamic_rotate %632 by %c127_i32_155 dim 1 : vector<16x128xf32>, i32 -> vector<16x128xf32>
    %637 = vector.broadcast %cst_49 : f32 to vector<16x128xf32>
    %638 = arith.select %37, %636, %637 : vector<16x128xi1>, vector<16x128xf32>
    %639 = arith.maximumf %635, %638 : vector<16x128xf32>
    %640 = arith.maximumf %632, %639 : vector<16x128xf32>
    %c1_i32_156 = arith.constant 1 : i32
    %641 = tpu.dynamic_rotate %640 by %c1_i32_156 dim 0 : vector<16x128xf32>, i32 -> vector<16x128xf32>
    %642 = vector.broadcast %cst_49 : f32 to vector<16x128xf32>
    %643 = arith.select %39, %641, %642 : vector<16x128xi1>, vector<16x128xf32>
    %c15_i32_157 = arith.constant 15 : i32
    %644 = tpu.dynamic_rotate %640 by %c15_i32_157 dim 0 : vector<16x128xf32>, i32 -> vector<16x128xf32>
    %645 = vector.broadcast %cst_49 : f32 to vector<16x128xf32>
    %646 = arith.select %41, %644, %645 : vector<16x128xi1>, vector<16x128xf32>
    %647 = arith.maximumf %643, %646 : vector<16x128xf32>
    %648 = arith.maximumf %640, %647 : vector<16x128xf32>
    %649 = arith.mulf %154, %648 : vector<16x128xf32>
    %650 = arith.addf %649, %157 : vector<16x128xf32>
    %651 = arith.maximumf %632, %650 : vector<16x128xf32>
    %c26_i32 = arith.constant 26 : i32
    %c1_i32_158 = arith.constant 1 : i32
    %652 = tpu.dynamic_rotate %651 by %c1_i32_158 dim 1 : vector<16x128xf32>, i32 -> vector<16x128xf32>
    %653 = vector.broadcast %cst_49 : f32 to vector<16x128xf32>
    %654 = arith.select %35, %652, %653 : vector<16x128xi1>, vector<16x128xf32>
    %c127_i32_159 = arith.constant 127 : i32
    %655 = tpu.dynamic_rotate %651 by %c127_i32_159 dim 1 : vector<16x128xf32>, i32 -> vector<16x128xf32>
    %656 = vector.broadcast %cst_49 : f32 to vector<16x128xf32>
    %657 = arith.select %37, %655, %656 : vector<16x128xi1>, vector<16x128xf32>
    %658 = arith.maximumf %654, %657 : vector<16x128xf32>
    %659 = arith.maximumf %651, %658 : vector<16x128xf32>
    %c1_i32_160 = arith.constant 1 : i32
    %660 = tpu.dynamic_rotate %659 by %c1_i32_160 dim 0 : vector<16x128xf32>, i32 -> vector<16x128xf32>
    %661 = vector.broadcast %cst_49 : f32 to vector<16x128xf32>
    %662 = arith.select %39, %660, %661 : vector<16x128xi1>, vector<16x128xf32>
    %c15_i32_161 = arith.constant 15 : i32
    %663 = tpu.dynamic_rotate %659 by %c15_i32_161 dim 0 : vector<16x128xf32>, i32 -> vector<16x128xf32>
    %664 = vector.broadcast %cst_49 : f32 to vector<16x128xf32>
    %665 = arith.select %41, %663, %664 : vector<16x128xi1>, vector<16x128xf32>
    %666 = arith.maximumf %662, %665 : vector<16x128xf32>
    %667 = arith.maximumf %659, %666 : vector<16x128xf32>
    %668 = arith.mulf %154, %667 : vector<16x128xf32>
    %669 = arith.addf %668, %157 : vector<16x128xf32>
    %670 = arith.maximumf %651, %669 : vector<16x128xf32>
    %c27_i32 = arith.constant 27 : i32
    %c1_i32_162 = arith.constant 1 : i32
    %671 = tpu.dynamic_rotate %670 by %c1_i32_162 dim 1 : vector<16x128xf32>, i32 -> vector<16x128xf32>
    %672 = vector.broadcast %cst_49 : f32 to vector<16x128xf32>
    %673 = arith.select %35, %671, %672 : vector<16x128xi1>, vector<16x128xf32>
    %c127_i32_163 = arith.constant 127 : i32
    %674 = tpu.dynamic_rotate %670 by %c127_i32_163 dim 1 : vector<16x128xf32>, i32 -> vector<16x128xf32>
    %675 = vector.broadcast %cst_49 : f32 to vector<16x128xf32>
    %676 = arith.select %37, %674, %675 : vector<16x128xi1>, vector<16x128xf32>
    %677 = arith.maximumf %673, %676 : vector<16x128xf32>
    %678 = arith.maximumf %670, %677 : vector<16x128xf32>
    %c1_i32_164 = arith.constant 1 : i32
    %679 = tpu.dynamic_rotate %678 by %c1_i32_164 dim 0 : vector<16x128xf32>, i32 -> vector<16x128xf32>
    %680 = vector.broadcast %cst_49 : f32 to vector<16x128xf32>
    %681 = arith.select %39, %679, %680 : vector<16x128xi1>, vector<16x128xf32>
    %c15_i32_165 = arith.constant 15 : i32
    %682 = tpu.dynamic_rotate %678 by %c15_i32_165 dim 0 : vector<16x128xf32>, i32 -> vector<16x128xf32>
    %683 = vector.broadcast %cst_49 : f32 to vector<16x128xf32>
    %684 = arith.select %41, %682, %683 : vector<16x128xi1>, vector<16x128xf32>
    %685 = arith.maximumf %681, %684 : vector<16x128xf32>
    %686 = arith.maximumf %678, %685 : vector<16x128xf32>
    %687 = arith.mulf %154, %686 : vector<16x128xf32>
    %688 = arith.addf %687, %157 : vector<16x128xf32>
    %689 = arith.maximumf %670, %688 : vector<16x128xf32>
    %c28_i32 = arith.constant 28 : i32
    %c1_i32_166 = arith.constant 1 : i32
    %690 = tpu.dynamic_rotate %689 by %c1_i32_166 dim 1 : vector<16x128xf32>, i32 -> vector<16x128xf32>
    %691 = vector.broadcast %cst_49 : f32 to vector<16x128xf32>
    %692 = arith.select %35, %690, %691 : vector<16x128xi1>, vector<16x128xf32>
    %c127_i32_167 = arith.constant 127 : i32
    %693 = tpu.dynamic_rotate %689 by %c127_i32_167 dim 1 : vector<16x128xf32>, i32 -> vector<16x128xf32>
    %694 = vector.broadcast %cst_49 : f32 to vector<16x128xf32>
    %695 = arith.select %37, %693, %694 : vector<16x128xi1>, vector<16x128xf32>
    %696 = arith.maximumf %692, %695 : vector<16x128xf32>
    %697 = arith.maximumf %689, %696 : vector<16x128xf32>
    %c1_i32_168 = arith.constant 1 : i32
    %698 = tpu.dynamic_rotate %697 by %c1_i32_168 dim 0 : vector<16x128xf32>, i32 -> vector<16x128xf32>
    %699 = vector.broadcast %cst_49 : f32 to vector<16x128xf32>
    %700 = arith.select %39, %698, %699 : vector<16x128xi1>, vector<16x128xf32>
    %c15_i32_169 = arith.constant 15 : i32
    %701 = tpu.dynamic_rotate %697 by %c15_i32_169 dim 0 : vector<16x128xf32>, i32 -> vector<16x128xf32>
    %702 = vector.broadcast %cst_49 : f32 to vector<16x128xf32>
    %703 = arith.select %41, %701, %702 : vector<16x128xi1>, vector<16x128xf32>
    %704 = arith.maximumf %700, %703 : vector<16x128xf32>
    %705 = arith.maximumf %697, %704 : vector<16x128xf32>
    %706 = arith.mulf %154, %705 : vector<16x128xf32>
    %707 = arith.addf %706, %157 : vector<16x128xf32>
    %708 = arith.maximumf %689, %707 : vector<16x128xf32>
    %c29_i32 = arith.constant 29 : i32
    %c1_i32_170 = arith.constant 1 : i32
    %709 = tpu.dynamic_rotate %708 by %c1_i32_170 dim 1 : vector<16x128xf32>, i32 -> vector<16x128xf32>
    %710 = vector.broadcast %cst_49 : f32 to vector<16x128xf32>
    %711 = arith.select %35, %709, %710 : vector<16x128xi1>, vector<16x128xf32>
    %c127_i32_171 = arith.constant 127 : i32
    %712 = tpu.dynamic_rotate %708 by %c127_i32_171 dim 1 : vector<16x128xf32>, i32 -> vector<16x128xf32>
    %713 = vector.broadcast %cst_49 : f32 to vector<16x128xf32>
    %714 = arith.select %37, %712, %713 : vector<16x128xi1>, vector<16x128xf32>
    %715 = arith.maximumf %711, %714 : vector<16x128xf32>
    %716 = arith.maximumf %708, %715 : vector<16x128xf32>
    %c1_i32_172 = arith.constant 1 : i32
    %717 = tpu.dynamic_rotate %716 by %c1_i32_172 dim 0 : vector<16x128xf32>, i32 -> vector<16x128xf32>
    %718 = vector.broadcast %cst_49 : f32 to vector<16x128xf32>
    %719 = arith.select %39, %717, %718 : vector<16x128xi1>, vector<16x128xf32>
    %c15_i32_173 = arith.constant 15 : i32
    %720 = tpu.dynamic_rotate %716 by %c15_i32_173 dim 0 : vector<16x128xf32>, i32 -> vector<16x128xf32>
    %721 = vector.broadcast %cst_49 : f32 to vector<16x128xf32>
    %722 = arith.select %41, %720, %721 : vector<16x128xi1>, vector<16x128xf32>
    %723 = arith.maximumf %719, %722 : vector<16x128xf32>
    %724 = arith.maximumf %716, %723 : vector<16x128xf32>
    %725 = arith.mulf %154, %724 : vector<16x128xf32>
    %726 = arith.addf %725, %157 : vector<16x128xf32>
    %727 = arith.maximumf %708, %726 : vector<16x128xf32>
    %c30_i32 = arith.constant 30 : i32
    %c1_i32_174 = arith.constant 1 : i32
    %728 = tpu.dynamic_rotate %727 by %c1_i32_174 dim 1 : vector<16x128xf32>, i32 -> vector<16x128xf32>
    %729 = vector.broadcast %cst_49 : f32 to vector<16x128xf32>
    %730 = arith.select %35, %728, %729 : vector<16x128xi1>, vector<16x128xf32>
    %c127_i32_175 = arith.constant 127 : i32
    %731 = tpu.dynamic_rotate %727 by %c127_i32_175 dim 1 : vector<16x128xf32>, i32 -> vector<16x128xf32>
    %732 = vector.broadcast %cst_49 : f32 to vector<16x128xf32>
    %733 = arith.select %37, %731, %732 : vector<16x128xi1>, vector<16x128xf32>
    %734 = arith.maximumf %730, %733 : vector<16x128xf32>
    %735 = arith.maximumf %727, %734 : vector<16x128xf32>
    %c1_i32_176 = arith.constant 1 : i32
    %736 = tpu.dynamic_rotate %735 by %c1_i32_176 dim 0 : vector<16x128xf32>, i32 -> vector<16x128xf32>
    %737 = vector.broadcast %cst_49 : f32 to vector<16x128xf32>
    %738 = arith.select %39, %736, %737 : vector<16x128xi1>, vector<16x128xf32>
    %c15_i32_177 = arith.constant 15 : i32
    %739 = tpu.dynamic_rotate %735 by %c15_i32_177 dim 0 : vector<16x128xf32>, i32 -> vector<16x128xf32>
    %740 = vector.broadcast %cst_49 : f32 to vector<16x128xf32>
    %741 = arith.select %41, %739, %740 : vector<16x128xi1>, vector<16x128xf32>
    %742 = arith.maximumf %738, %741 : vector<16x128xf32>
    %743 = arith.maximumf %735, %742 : vector<16x128xf32>
    %744 = arith.mulf %154, %743 : vector<16x128xf32>
    %745 = arith.addf %744, %157 : vector<16x128xf32>
    %746 = arith.maximumf %727, %745 : vector<16x128xf32>
    %c31_i32 = arith.constant 31 : i32
    %c1_i32_178 = arith.constant 1 : i32
    %747 = tpu.dynamic_rotate %746 by %c1_i32_178 dim 1 : vector<16x128xf32>, i32 -> vector<16x128xf32>
    %748 = vector.broadcast %cst_49 : f32 to vector<16x128xf32>
    %749 = arith.select %35, %747, %748 : vector<16x128xi1>, vector<16x128xf32>
    %c127_i32_179 = arith.constant 127 : i32
    %750 = tpu.dynamic_rotate %746 by %c127_i32_179 dim 1 : vector<16x128xf32>, i32 -> vector<16x128xf32>
    %751 = vector.broadcast %cst_49 : f32 to vector<16x128xf32>
    %752 = arith.select %37, %750, %751 : vector<16x128xi1>, vector<16x128xf32>
    %753 = arith.maximumf %749, %752 : vector<16x128xf32>
    %754 = arith.maximumf %746, %753 : vector<16x128xf32>
    %c1_i32_180 = arith.constant 1 : i32
    %755 = tpu.dynamic_rotate %754 by %c1_i32_180 dim 0 : vector<16x128xf32>, i32 -> vector<16x128xf32>
    %756 = vector.broadcast %cst_49 : f32 to vector<16x128xf32>
    %757 = arith.select %39, %755, %756 : vector<16x128xi1>, vector<16x128xf32>
    %c15_i32_181 = arith.constant 15 : i32
    %758 = tpu.dynamic_rotate %754 by %c15_i32_181 dim 0 : vector<16x128xf32>, i32 -> vector<16x128xf32>
    %759 = vector.broadcast %cst_49 : f32 to vector<16x128xf32>
    %760 = arith.select %41, %758, %759 : vector<16x128xi1>, vector<16x128xf32>
    %761 = arith.maximumf %757, %760 : vector<16x128xf32>
    %762 = arith.maximumf %754, %761 : vector<16x128xf32>
    %763 = arith.mulf %154, %762 : vector<16x128xf32>
    %764 = arith.addf %763, %157 : vector<16x128xf32>
    %765 = arith.maximumf %746, %764 : vector<16x128xf32>
    %c32_i32 = arith.constant 32 : i32
    %c1_i32_182 = arith.constant 1 : i32
    %766 = tpu.dynamic_rotate %765 by %c1_i32_182 dim 1 : vector<16x128xf32>, i32 -> vector<16x128xf32>
    %767 = vector.broadcast %cst_49 : f32 to vector<16x128xf32>
    %768 = arith.select %35, %766, %767 : vector<16x128xi1>, vector<16x128xf32>
    %c127_i32_183 = arith.constant 127 : i32
    %769 = tpu.dynamic_rotate %765 by %c127_i32_183 dim 1 : vector<16x128xf32>, i32 -> vector<16x128xf32>
    %770 = vector.broadcast %cst_49 : f32 to vector<16x128xf32>
    %771 = arith.select %37, %769, %770 : vector<16x128xi1>, vector<16x128xf32>
    %772 = arith.maximumf %768, %771 : vector<16x128xf32>
    %773 = arith.maximumf %765, %772 : vector<16x128xf32>
    %c1_i32_184 = arith.constant 1 : i32
    %774 = tpu.dynamic_rotate %773 by %c1_i32_184 dim 0 : vector<16x128xf32>, i32 -> vector<16x128xf32>
    %775 = vector.broadcast %cst_49 : f32 to vector<16x128xf32>
    %776 = arith.select %39, %774, %775 : vector<16x128xi1>, vector<16x128xf32>
    %c15_i32_185 = arith.constant 15 : i32
    %777 = tpu.dynamic_rotate %773 by %c15_i32_185 dim 0 : vector<16x128xf32>, i32 -> vector<16x128xf32>
    %778 = vector.broadcast %cst_49 : f32 to vector<16x128xf32>
    %779 = arith.select %41, %777, %778 : vector<16x128xi1>, vector<16x128xf32>
    %780 = arith.maximumf %776, %779 : vector<16x128xf32>
    %781 = arith.maximumf %773, %780 : vector<16x128xf32>
    %782 = arith.mulf %154, %781 : vector<16x128xf32>
    %783 = arith.addf %782, %157 : vector<16x128xf32>
    %784 = arith.maximumf %765, %783 : vector<16x128xf32>
    %c33_i32 = arith.constant 33 : i32
    %c1_i32_186 = arith.constant 1 : i32
    %785 = tpu.dynamic_rotate %784 by %c1_i32_186 dim 1 : vector<16x128xf32>, i32 -> vector<16x128xf32>
    %786 = vector.broadcast %cst_49 : f32 to vector<16x128xf32>
    %787 = arith.select %35, %785, %786 : vector<16x128xi1>, vector<16x128xf32>
    %c127_i32_187 = arith.constant 127 : i32
    %788 = tpu.dynamic_rotate %784 by %c127_i32_187 dim 1 : vector<16x128xf32>, i32 -> vector<16x128xf32>
    %789 = vector.broadcast %cst_49 : f32 to vector<16x128xf32>
    %790 = arith.select %37, %788, %789 : vector<16x128xi1>, vector<16x128xf32>
    %791 = arith.maximumf %787, %790 : vector<16x128xf32>
    %792 = arith.maximumf %784, %791 : vector<16x128xf32>
    %c1_i32_188 = arith.constant 1 : i32
    %793 = tpu.dynamic_rotate %792 by %c1_i32_188 dim 0 : vector<16x128xf32>, i32 -> vector<16x128xf32>
    %794 = vector.broadcast %cst_49 : f32 to vector<16x128xf32>
    %795 = arith.select %39, %793, %794 : vector<16x128xi1>, vector<16x128xf32>
    %c15_i32_189 = arith.constant 15 : i32
    %796 = tpu.dynamic_rotate %792 by %c15_i32_189 dim 0 : vector<16x128xf32>, i32 -> vector<16x128xf32>
    %797 = vector.broadcast %cst_49 : f32 to vector<16x128xf32>
    %798 = arith.select %41, %796, %797 : vector<16x128xi1>, vector<16x128xf32>
    %799 = arith.maximumf %795, %798 : vector<16x128xf32>
    %800 = arith.maximumf %792, %799 : vector<16x128xf32>
    %801 = arith.mulf %154, %800 : vector<16x128xf32>
    %802 = arith.addf %801, %157 : vector<16x128xf32>
    %803 = arith.maximumf %784, %802 : vector<16x128xf32>
    %c34_i32 = arith.constant 34 : i32
    %c1_i32_190 = arith.constant 1 : i32
    %804 = tpu.dynamic_rotate %803 by %c1_i32_190 dim 1 : vector<16x128xf32>, i32 -> vector<16x128xf32>
    %805 = vector.broadcast %cst_49 : f32 to vector<16x128xf32>
    %806 = arith.select %35, %804, %805 : vector<16x128xi1>, vector<16x128xf32>
    %c127_i32_191 = arith.constant 127 : i32
    %807 = tpu.dynamic_rotate %803 by %c127_i32_191 dim 1 : vector<16x128xf32>, i32 -> vector<16x128xf32>
    %808 = vector.broadcast %cst_49 : f32 to vector<16x128xf32>
    %809 = arith.select %37, %807, %808 : vector<16x128xi1>, vector<16x128xf32>
    %810 = arith.maximumf %806, %809 : vector<16x128xf32>
    %811 = arith.maximumf %803, %810 : vector<16x128xf32>
    %c1_i32_192 = arith.constant 1 : i32
    %812 = tpu.dynamic_rotate %811 by %c1_i32_192 dim 0 : vector<16x128xf32>, i32 -> vector<16x128xf32>
    %813 = vector.broadcast %cst_49 : f32 to vector<16x128xf32>
    %814 = arith.select %39, %812, %813 : vector<16x128xi1>, vector<16x128xf32>
    %c15_i32_193 = arith.constant 15 : i32
    %815 = tpu.dynamic_rotate %811 by %c15_i32_193 dim 0 : vector<16x128xf32>, i32 -> vector<16x128xf32>
    %816 = vector.broadcast %cst_49 : f32 to vector<16x128xf32>
    %817 = arith.select %41, %815, %816 : vector<16x128xi1>, vector<16x128xf32>
    %818 = arith.maximumf %814, %817 : vector<16x128xf32>
    %819 = arith.maximumf %811, %818 : vector<16x128xf32>
    %820 = arith.mulf %154, %819 : vector<16x128xf32>
    %821 = arith.addf %820, %157 : vector<16x128xf32>
    %822 = arith.maximumf %803, %821 : vector<16x128xf32>
    %c0_194 = arith.constant 0 : index
    %c0_195 = arith.constant 0 : index
    %c0_196 = arith.constant 0 : index
    %823 = vector.load %arg5[%c0_194, %c0_195, %c0_196] : memref<1x16x128xf32, #tpu.memory_space<vmem>>, vector<1x16x128xf32>
    %824 = vector.shape_cast %823 : vector<1x16x128xf32> to vector<16x128xf32>
    %825 = vector.shape_cast %822 : vector<16x128xf32> to vector<1x16x128xf32>
    tpu.vector_store %arg5[%c0_194, %c0_195, %c0_196], %825 {strides = array<i32>} : memref<1x16x128xf32, #tpu.memory_space<vmem>>, vector<1x16x128xf32>,
    %c0_197 = arith.constant 0 : index
    %c0_198 = arith.constant 0 : index
    %c0_199 = arith.constant 0 : index
    %826 = vector.load %arg6[%c0_197, %c0_198, %c0_199] : memref<1x16x128xf32, #tpu.memory_space<vmem>>, vector<1x16x128xf32>
    %827 = vector.shape_cast %826 : vector<1x16x128xf32> to vector<16x128xf32>
    %828 = vector.shape_cast %154 : vector<16x128xf32> to vector<1x16x128xf32>
    tpu.vector_store %arg6[%c0_197, %c0_198, %c0_199], %828 {strides = array<i32>} : memref<1x16x128xf32, #tpu.memory_space<vmem>>, vector<1x16x128xf32>,
    return
  }
  func.func @transform_0(%arg0: i32) -> i32 {
    %c0_i32 = arith.constant 0 : i32
    %c0_i32_0 = arith.constant 0 : i32
    return %c0_i32 : i32
  }
  func.func @transform_1(%arg0: i32) -> i32 {
    %c0_i32 = arith.constant 0 : i32
    %c0_i32_0 = arith.constant 0 : i32
    return %c0_i32 : i32
  }
  func.func @transform_2(%arg0: i32) -> i32 {
    %c0_i32 = arith.constant 0 : i32
    %c0_i32_0 = arith.constant 0 : i32
    return %c0_i32 : i32
  }
  func.func @transform_3(%arg0: i32) -> (i32, i32, i32, i32) {
    %c0_i32 = arith.constant 0 : i32
    %c0_i32_0 = arith.constant 0 : i32
    %c0_i32_1 = arith.constant 0 : i32
    %c0_i32_2 = arith.constant 0 : i32
    return %arg0, %c0_i32, %c0_i32_0, %c0_i32_1 : i32, i32, i32, i32
  }
  func.func @transform_4(%arg0: i32) -> (i32, i32, i32) {
    %c0_i32 = arith.constant 0 : i32
    %c0_i32_0 = arith.constant 0 : i32
    %c0_i32_1 = arith.constant 0 : i32
    return %arg0, %c0_i32, %c0_i32_0 : i32, i32, i32
  }
  func.func @transform_5(%arg0: i32) -> (i32, i32, i32) {
    %c0_i32 = arith.constant 0 : i32
    %c0_i32_0 = arith.constant 0 : i32
    %c0_i32_1 = arith.constant 0 : i32
    return %arg0, %c0_i32, %c0_i32_0 : i32, i32, i32
  }
}

</mosaic_0001>

<llo_original>
// kernel: tpu_custom_call.1
$region0: #{tpu_custom_call.1}
  #allocation0 [shape = 'u32[]', space=smem, size = 0x4, offset = 0x4, fixed_abs, tag = 'smem constant byte address 0x4 - core index']
  #allocation1 [shape = 'u32[72,128]{1,0:T(1,128)}', space=vmem, size = 0x9000, scoped, tag = 'internal scratch']
  %s0 = inlined_call_operand.hbm [shape: f32[9], index: 0, kind: input, shape index: {}]
  %s1 = inlined_call_operand.hbm [shape: f32[9], index: 1, kind: input, shape index: {}]
  %s2 = inlined_call_operand.vmem [shape: f32[2], index: 2, kind: input, shape index: {}]
  %s3 = inlined_call_operand.hbm [shape: f32[1,2,16,128], index: 3, kind: input, shape index: {}]
  %s4 = inlined_call_operand.hbm [shape: f32[1,16,128], index: 4, kind: output, shape index: {0}]
  %s5 = inlined_call_operand.hbm [shape: f32[1,16,128], index: 5, kind: output, shape index: {1}]
  %6 = xla_tuple %s4, %s5
  %s7 = sld [smem:[#allocation0]]
  $region50: #{tpu_custom_call.1} parent=0
    _
  %s9 = ssub.s32 1, %s7
  %s10 = scalar_select 0, %s9, %s7
  $region1: #{tpu_custom_call.1} parent=0
    #allocation2 [shape = 'u8[512]{0}', space=smem, size = 0x200, scoped, tag = 'input window, operand 0, single buffered']
    #allocation3 [shape = 's32[1]{0}', space=sflag, size = 0x4, scoped, tag = 'scoped memory for tpu_custom_call.1']
    #allocation4 [shape = 's32[1]{0}', space=sflag, size = 0x4, scoped, tag = 'scoped memory for tpu_custom_call.1']
    #allocation5 [shape = 's32[1]{0}', space=sflag, size = 0x4, scoped, tag = 'scoped memory for tpu_custom_call.1']
    #allocation6 [shape = 's32[1]{0}', space=sflag, size = 0x4, scoped, tag = 'scoped memory for tpu_custom_call.1']
    #allocation7 [shape = 'u8[512]{0}', space=smem, size = 0x200, scoped, tag = 'input window, operand 1, single buffered']
    #allocation8 [shape = 's32[1]{0}', space=sflag, size = 0x4, scoped, tag = 'scoped memory for tpu_custom_call.1']
    #allocation9 [shape = 'u8[512]{0}', space=smem, size = 0x200, scoped, tag = 'input window, operand 2, single buffered']
    #allocation10 [shape = 'u8[16384]{0}', space=vmem, size = 0x4000, scoped, tag = 'input window, operand 3, single buffered']
    #allocation11 [shape = 'u8[8192]{0}', space=vmem, size = 0x2000, scoped, tag = 'output window, operand 0, single buffered']
    #allocation12 [shape = 'u8[8192]{0}', space=vmem, size = 0x2000, scoped, tag = 'output window, operand 1, single buffered']
    #allocation13 [shape = 's32[1]{0}', space=sflag, size = 0x4, scoped, tag = 'scoped memory for tpu_custom_call.1']
    %11 = vsyncpa [#allocation5], 0
    %12 = vsyncpa [#allocation8], 0
    %13 = vsyncpa [#allocation6], 0
    %14 = vsyncpa [#allocation3], 0
    %15 = vsyncpa [#allocation4], 0
    %16 = vsyncpa [#allocation13], 0
    // Predicated region
    $region2: #{tpu_custom_call.1} parent=1 // pred_check
      _
    $region3: #{tpu_custom_call.1} parent=1 // pred_check_branch
      %18 = sbr.rel (0) target = $region5
    $region4: #{tpu_custom_call.1} parent=1 // pred_region
      %20 = vsyncadd [#allocation5], 0
      %s22 = sshll.u32 %s0, 4
      %s23 = int_to_ptr.hbm [resolvable:$true] %s22
      %25 = dma.hbm_to_smem %s23, 16, [#allocation2], [#allocation5]
    $region5: #{tpu_custom_call.1} parent=1 // pred_fallthru
      _
    // Predicated region
    $region6: #{tpu_custom_call.1} parent=1 // pred_check
      _
    $region7: #{tpu_custom_call.1} parent=1 // pred_check_branch
      %27 = sbr.rel (0) target = $region9
    $region8: #{tpu_custom_call.1} parent=1 // pred_region
      %29 = vsyncadd [#allocation8], 0
      %s31 = sshll.u32 %s1, 4
      %s32 = int_to_ptr.hbm [resolvable:$true] %s31
      %34 = dma.hbm_to_smem %s32, 16, [#allocation7], [#allocation8]
    $region9: #{tpu_custom_call.1} parent=1 // pred_fallthru
      _
    // Predicated region
    $region10: #{tpu_custom_call.1} parent=1 // pred_check
      _
    $region11: #{tpu_custom_call.1} parent=1 // pred_check_branch
      %36 = sbr.rel (0) target = $region13
    $region12: #{tpu_custom_call.1} parent=1 // pred_region
      %38 = vsyncadd [#allocation6], 0
      %s40 = sshll.u32 %s2, 4
      %s41 = int_to_ptr.vmem [resolvable:$true] %s40
      %43 = dma.vmem_to_smem %s41, 16, [#allocation9], [#allocation6]
    $region13: #{tpu_custom_call.1} parent=1 // pred_fallthru
      _
    // Predicated region
    $region14: #{tpu_custom_call.1} parent=1 // pred_check
      _
    $region15: #{tpu_custom_call.1} parent=1 // pred_check_branch
      %45 = sbr.rel (0) target = $region17
    $region16: #{tpu_custom_call.1} parent=1 // pred_region
      %47 = vsyncadd [#allocation3], 0
      %s48 = sshll.u32 %s3, 4
      %s49 = int_to_ptr.hbm [resolvable:$true] %s48
      %s50 = sshll.u32 [#allocation10], 4
      %s51 = int_to_ptr.vmem [resolvable:$true] %s50
      %56 = dma.hbm_to_vmem [thread:$0]  %s49, 512, %s51, [#allocation3], 128, 128, 8
    $region17: #{tpu_custom_call.1} parent=1 // pred_fallthru
      _
    // Predicated region
    $region18: #{tpu_custom_call.1} parent=1 // pred_check
      _
    $region19: #{tpu_custom_call.1} parent=1 // pred_check_branch
      %58 = sbr.rel (0) target = $region21
    $region20: #{tpu_custom_call.1} parent=1 // pred_region
      %60 = dma.done [#allocation5], 16
    $region21: #{tpu_custom_call.1} parent=1 // pred_fallthru
      _
    // Predicated region
    $region22: #{tpu_custom_call.1} parent=1 // pred_check
      _
    $region23: #{tpu_custom_call.1} parent=1 // pred_check_branch
      %62 = sbr.rel (0) target = $region25
    $region24: #{tpu_custom_call.1} parent=1 // pred_region
      %64 = dma.done [#allocation8], 16
    $region25: #{tpu_custom_call.1} parent=1 // pred_fallthru
      _
    // Predicated region
    $region26: #{tpu_custom_call.1} parent=1 // pred_check
      _
    $region27: #{tpu_custom_call.1} parent=1 // pred_check_branch
      %66 = sbr.rel (0) target = $region29
    $region28: #{tpu_custom_call.1} parent=1 // pred_region
      %68 = dma.done [#allocation6], 16
    $region29: #{tpu_custom_call.1} parent=1 // pred_fallthru
      _
    // Predicated region
    $region30: #{tpu_custom_call.1} parent=1 // pred_check
      _
    $region31: #{tpu_custom_call.1} parent=1 // pred_check_branch
      %70 = sbr.rel (0) target = $region33
    $region32: #{tpu_custom_call.1} parent=1 // pred_region
      %72 = dma.done [#allocation3], 512
    $region33: #{tpu_custom_call.1} parent=1 // pred_fallthru
      _
    %73 = sfence
    %v74 = vlaneseq
    %v75 = vshrl.u32 %v74, 7
    %v76 = vadd.s32 %v75, 8
    %vm77 = vcmp.lt.s32.totalorder %v75, 0
    %v78 = vsub.s32 0, %v75
    %v79 = vsel %vm77, %v78, %v75
    %v80 = vshrl.u32 %v79, 4
    %v81 = vand.u32 %v79, 15
    %v82 = vsub.s32 0, %v81
    %v83 = vsel %vm77, %v82, %v81
    %vm84 = vcmp.lt.s32.totalorder %v76, 0
    %v85 = vsub.s32 0, %v76
    %v86 = vsel %vm84, %v85, %v76
    %v87 = vshrl.u32 %v86, 4
    %v88 = vand.u32 %v86, 15
    %v89 = vsub.s32 0, %v88
    %v90 = vsel %vm84, %v89, %v88
    %vm91 = vcmp.ne.s32.totalorder %v83, 0
    %vm92 = vcmp.ne.s32.totalorder %v90, 0
    %vm93 = vcmp.lt.s32.totalorder %v83, 0
    %vm94 = vcmp.lt.s32.totalorder %v90, 0
    %vm95 = vmand %vm93, %vm91
    %vm96 = vmand %vm94, %vm92
    %v97 = vadd.s32 %v83, 16
    %v98 = vadd.s32 %v90, 16
    %v99 = vsel %vm95, %v97, %v83
    %v100 = vsel %vm96, %v98, %v90
    %v101 = vlaneseq
    %v102 = vand.u32 %v101, 127
    %vm103 = vcmp.lt.s32.totalorder %v102, 0
    %v104 = vsub.s32 0, %v102
    %v105 = vsel %vm103, %v104, %v102
    %v106 = vshrl.u32 %v105, 4
    %v107 = vand.u32 %v105, 15
    %v108 = vsub.s32 0, %v107
    %v109 = vsel %vm103, %v108, %v107
    %vm110 = vcmp.ne.s32.totalorder %v109, 0
    %vm111 = vcmp.lt.s32.totalorder %v109, 0
    %vm112 = vmand %vm111, %vm110
    %v113 = vadd.s32 %v109, 16
    %v114 = vsel %vm112, %v113, %v109
    %vm115 = vcmp.gt.s32.totalorder %v114, 0
    %vm116 = vcmp.lt.s32.totalorder %v114, 15
    %vm117 = vcmp.gt.s32.totalorder %v99, 0
    %vm118 = vcmp.gt.s32.totalorder %v100, 0
    %vm119 = vcmp.lt.s32.totalorder %v99, 15
    %vm120 = vcmp.lt.s32.totalorder %v100, 15
    %v121 = vld [vmem:[#allocation10] sm:$0xff]
    %v122 = vld [vmem:[#allocation10 + $0x8] sm:$0xff]
    %s123 = scalar_lea.vmem [#allocation10], 16
    %v124 = vld [vmem:[%s123] sm:$0xff]
    %v125 = vld [vmem:[%s123 + $0x8] sm:$0xff]
    %v126 = vsub.f32 %v124, 1.0
    %v127 = vsub.f32 %v125, 1.0
    %s128 = sld [smem:[#allocation9]]
    %129 = vrot.lane.b32.xlu0 %v121, 1
    %v130 = vpop.permute.xlu0 %129
    %131 = vrot.lane.b32.xlu0 %v122, 1
    %v132 = vpop.permute.xlu0 %131
    %v133 = vsel %vm115, %v130, 0.0
    %v134 = vsel %vm115, %v132, 0.0
    %135 = vrot.lane.b32.xlu0 %v121, 127
    %v136 = vpop.permute.xlu0 %135
    %137 = vrot.lane.b32.xlu0 %v122, 127
    %v138 = vpop.permute.xlu0 %137
    %v139 = vsel %vm116, %v136, 0.0
    %v140 = vsel %vm116, %v138, 0.0
    %s141 = sld [smem:[#allocation2]]
    %v142 = vstv %s141
    %v143 = vmul.f32 %v142, %v133
    %v144 = vmul.f32 %v142, %v134
    %s145 = sld [smem:[#allocation2 + $0x1]]
    %v146 = vstv %s145
    %v147 = vmul.f32 %v146, %v121
    %v148 = vmul.f32 %v146, %v122
    %v149 = vadd.f32 %v143, %v147
    %v150 = vadd.f32 %v144, %v148
    %s151 = sld [smem:[#allocation2 + $0x2]]
    %v152 = vstv %s151
    %v153 = vmul.f32 %v152, %v139
    %v154 = vmul.f32 %v152, %v140
    %v155 = vadd.f32 %v149, %v153
    %v156 = vadd.f32 %v150, %v154
    %s157 = sld [smem:[#allocation2 + $0x3]]
    %v158 = vstv %s157
    %v159 = vmul.f32 %v158, %v133
    %v160 = vmul.f32 %v158, %v134
    %s161 = sld [smem:[#allocation2 + $0x4]]
    %v162 = vstv %s161
    %v163 = vmul.f32 %v162, %v121
    %v164 = vmul.f32 %v162, %v122
    %v165 = vadd.f32 %v159, %v163
    %v166 = vadd.f32 %v160, %v164
    %s167 = sld [smem:[#allocation2 + $0x5]]
    %v168 = vstv %s167
    %v169 = vmul.f32 %v168, %v139
    %v170 = vmul.f32 %v168, %v140
    %v171 = vadd.f32 %v165, %v169
    %v172 = vadd.f32 %v166, %v170
    %s173 = sld [smem:[#allocation2 + $0x6]]
    %v174 = vstv %s173
    %v175 = vmul.f32 %v174, %v133
    %v176 = vmul.f32 %v174, %v134
    %s177 = sld [smem:[#allocation2 + $0x7]]
    %v178 = vstv %s177
    %v179 = vmul.f32 %v178, %v121
    %v180 = vmul.f32 %v178, %v122
    %v181 = vadd.f32 %v175, %v179
    %v182 = vadd.f32 %v176, %v180
    %s183 = sld [smem:[#allocation2 + $0x8]]
    %v184 = vstv %s183
    %v185 = vmul.f32 %v184, %v139
    %v186 = vmul.f32 %v184, %v140
    %v187 = vadd.f32 %v181, %v185
    %v188 = vadd.f32 %v182, %v186
    %v189 = vrot.slane %v155, 7
    %v190 = vrot.slane %v156, 7
    %vm191 = vcmp.lt.s32.totalorder %v75, 1
    %v192 = vsel %vm191, %v189, %v190
    %v193 = vsel %vm191, %v190, %v189
    %v194 = vsel %vm117, %v193, 0.0
    %v195 = vsel %vm118, %v192, 0.0
    %v196 = vadd.f32 %v171, %v194
    %v197 = vadd.f32 %v172, %v195
    %v198 = vrot.slane %v187, 1
    %v199 = vrot.slane %v188, 1
    %vm200 = vcmp.lt.s32.totalorder %v75, 7
    %v201 = vsel %vm200, %v198, %v199
    %v202 = vsel %vm200, %v199, %v198
    %v203 = vsel %vm119, %v201, 0.0
    %v204 = vsel %vm120, %v202, 0.0
    %v205 = vadd.f32 %v196, %v203
    %v206 = vadd.f32 %v197, %v204
    %v207 = vstv %s128
    %v208 = vadd.f32 %v205, %v207
    %v209 = vadd.f32 %v206, %v207
    %v210 = vmax.f32 %v208, 0.0
    %v211 = vmax.f32 %v209, 0.0
    %s212 = sld [smem:[#allocation9 + $0x1]]
    %213 = vrot.lane.b32.xlu0 %v210, 1
    %v214 = vpop.permute.xlu0 %213
    %215 = vrot.lane.b32.xlu0 %v211, 1
    %v216 = vpop.permute.xlu0 %215
    %v217 = vsel %vm115, %v214, 0.0
    %v218 = vsel %vm115, %v216, 0.0
    %219 = vrot.lane.b32.xlu0 %v210, 127
    %v220 = vpop.permute.xlu0 %219
    %221 = vrot.lane.b32.xlu0 %v211, 127
    %v222 = vpop.permute.xlu0 %221
    %v223 = vsel %vm116, %v220, 0.0
    %v224 = vsel %vm116, %v222, 0.0
    %s225 = sld [smem:[#allocation7]]
    %v226 = vstv %s225
    %v227 = vmul.f32 %v226, %v217
    %v228 = vmul.f32 %v226, %v218
    %s229 = sld [smem:[#allocation7 + $0x1]]
    %v230 = vstv %s229
    %v231 = vmul.f32 %v230, %v210
    %v232 = vmul.f32 %v230, %v211
    %v233 = vadd.f32 %v227, %v231
    %v234 = vadd.f32 %v228, %v232
    %s235 = sld [smem:[#allocation7 + $0x2]]
    %v236 = vstv %s235
    %v237 = vmul.f32 %v236, %v223
    %v238 = vmul.f32 %v236, %v224
    %v239 = vadd.f32 %v233, %v237
    %v240 = vadd.f32 %v234, %v238
    %s241 = sld [smem:[#allocation7 + $0x3]]
    %v242 = vstv %s241
    %v243 = vmul.f32 %v242, %v217
    %v244 = vmul.f32 %v242, %v218
    %s245 = sld [smem:[#allocation7 + $0x4]]
    %v246 = vstv %s245
    %v247 = vmul.f32 %v246, %v210
    %v248 = vmul.f32 %v246, %v211
    %v249 = vadd.f32 %v243, %v247
    %v250 = vadd.f32 %v244, %v248
    %s251 = sld [smem:[#allocation7 + $0x5]]
    %v252 = vstv %s251
    %v253 = vmul.f32 %v252, %v223
    %v254 = vmul.f32 %v252, %v224
    %v255 = vadd.f32 %v249, %v253
    %v256 = vadd.f32 %v250, %v254
    %s257 = sld [smem:[#allocation7 + $0x6]]
    %v258 = vstv %s257
    %v259 = vmul.f32 %v258, %v217
    %v260 = vmul.f32 %v258, %v218
    %s261 = sld [smem:[#allocation7 + $0x7]]
    %v262 = vstv %s261
    %v263 = vmul.f32 %v262, %v210
    %v264 = vmul.f32 %v262, %v211
    %v265 = vadd.f32 %v259, %v263
    %v266 = vadd.f32 %v260, %v264
    %s267 = sld [smem:[#allocation7 + $0x8]]
    %v268 = vstv %s267
    %v269 = vmul.f32 %v268, %v223
    %v270 = vmul.f32 %v268, %v224
    %v271 = vadd.f32 %v265, %v269
    %v272 = vadd.f32 %v266, %v270
    %v273 = vrot.slane %v239, 7
    %v274 = vrot.slane %v240, 7
    %v275 = vsel %vm191, %v273, %v274
    %v276 = vsel %vm191, %v274, %v273
    %v277 = vsel %vm117, %v276, 0.0
    %v278 = vsel %vm118, %v275, 0.0
    %v279 = vadd.f32 %v255, %v277
    %v280 = vadd.f32 %v256, %v278
    %v281 = vrot.slane %v271, 1
    %v282 = vrot.slane %v272, 1
    %v283 = vsel %vm200, %v281, %v282
    %v284 = vsel %vm200, %v282, %v281
    %v285 = vsel %vm119, %v283, 0.0
    %v286 = vsel %vm120, %v284, 0.0
    %v287 = vadd.f32 %v279, %v285
    %v288 = vadd.f32 %v280, %v286
    %v289 = vstv %s212
    %v290 = vadd.f32 %v287, %v289
    %v291 = vadd.f32 %v288, %v289
    %v292 = vxor.u32 %v290, 2147483648
    %v293 = vxor.u32 %v291, 2147483648
    %v294 = vmul.f32 %v292, 1.442695
    %v295 = vpow.pop %v294
    %v296 = vmul.f32 %v293, 1.442695
    %v297 = vpow.pop %v296
    %v298 = vadd.f32 %v295, 1.0
    %v299 = vadd.f32 %v297, 1.0
    %v300 = vrcp.pop %v298
    %v301 = vmul.f32 %v298, %v300
    %v302 = vsub.f32 1.0, %v301
    %v303 = vmul.f32 %v300, %v302
    %v304 = vadd.f32 %v300, %v303
    %vm305 = vweird.f32 %v298
    %vm306 = vweird.f32 %v300
    %vm307 = vmor %vm305, %vm306
    %v308 = vsel %vm307, %v300, %v304
    %v309 = vand.u32 2147483647, %v298
    %vm310 = vcmp.eq.f32.partialorder %v309, 8.507059e+37
    %v311 = vand.u32 %v298, 2147483648
    %v312 = vor.u32 1.1754944e-38, %v311
    %v313 = vsel %vm310, %v312, %v308
    %v314 = vmul.f32 1.0, %v313
    %v315 = vrcp.pop %v299
    %v316 = vmul.f32 %v299, %v315
    %v317 = vsub.f32 1.0, %v316
    %v318 = vmul.f32 %v315, %v317
    %v319 = vadd.f32 %v315, %v318
    %vm320 = vweird.f32 %v299
    %vm321 = vweird.f32 %v315
    %vm322 = vmor %vm320, %vm321
    %v323 = vsel %vm322, %v315, %v319
    %v324 = vand.u32 2147483647, %v299
    %vm325 = vcmp.eq.f32.partialorder %v324, 8.507059e+37
    %v326 = vand.u32 %v299, 2147483648
    %v327 = vor.u32 1.1754944e-38, %v326
    %v328 = vsel %vm325, %v327, %v323
    %v329 = vmul.f32 1.0, %v328
    %v330 = vsub.f32 1.0, %v314
    %v331 = vsub.f32 1.0, %v329
    %v332 = vmul.f32 %v126, %v330
    %v333 = vmul.f32 %v127, %v331
    %334 = vrot.lane.b32.xlu0 %v126, 1
    %v335 = vpop.permute.xlu0 %334
    %336 = vrot.lane.b32.xlu0 %v127, 1
    %v337 = vpop.permute.xlu0 %336
    %v338 = vsel %vm115, %v335, -inf
    %v339 = vsel %vm115, %v337, -inf
    %340 = vrot.lane.b32.xlu0 %v126, 127
    %v341 = vpop.permute.xlu0 %340
    %342 = vrot.lane.b32.xlu0 %v127, 127
    %v343 = vpop.permute.xlu0 %342
    %v344 = vsel %vm116, %v341, -inf
    %v345 = vsel %vm116, %v343, -inf
    %v346 = vmax.f32 %v338, %v344
    %v347 = vmax.f32 %v339, %v345
    %v348 = vmax.f32 %v126, %v346
    %v349 = vmax.f32 %v127, %v347
    %v350 = vrot.slane %v348, 7
    %v351 = vrot.slane %v349, 7
    %v352 = vsel %vm191, %v350, %v351
    %v353 = vsel %vm191, %v351, %v350
    %v354 = vsel %vm117, %v353, -inf
    %v355 = vsel %vm118, %v352, -inf
    %v356 = vrot.slane %v348, 1
    %v357 = vrot.slane %v349, 1
    %v358 = vsel %vm200, %v356, %v357
    %v359 = vsel %vm200, %v357, %v356
    %v360 = vsel %vm119, %v358, -inf
    %v361 = vsel %vm120, %v359, -inf
    %v362 = vmax.f32 %v354, %v360
    %v363 = vmax.f32 %v355, %v361
    %v364 = vmax.f32 %v348, %v362
    %v365 = vmax.f32 %v349, %v363
    %v366 = vmul.f32 %v314, %v364
    %v367 = vmul.f32 %v329, %v365
    %v368 = vadd.f32 %v366, %v332
    %v369 = vadd.f32 %v367, %v333
    %v370 = vmax.f32 %v126, %v368
    %v371 = vmax.f32 %v127, %v369
    %372 = vrot.lane.b32.xlu0 %v370, 1
    %v373 = vpop.permute.xlu0 %372
    %374 = vrot.lane.b32.xlu0 %v371, 1
    %v375 = vpop.permute.xlu0 %374
    %v376 = vsel %vm115, %v373, -inf
    %v377 = vsel %vm115, %v375, -inf
    %378 = vrot.lane.b32.xlu0 %v370, 127
    %v379 = vpop.permute.xlu0 %378
    %380 = vrot.lane.b32.xlu0 %v371, 127
    %v381 = vpop.permute.xlu0 %380
    %v382 = vsel %vm116, %v379, -inf
    %v383 = vsel %vm116, %v381, -inf
    %v384 = vmax.f32 %v376, %v382
    %v385 = vmax.f32 %v377, %v383
    %v386 = vmax.f32 %v370, %v384
    %v387 = vmax.f32 %v371, %v385
    %v388 = vrot.slane %v386, 7
    %v389 = vrot.slane %v387, 7
    %v390 = vsel %vm191, %v388, %v389
    %v391 = vsel %vm191, %v389, %v388
    %v392 = vsel %vm117, %v391, -inf
    %v393 = vsel %vm118, %v390, -inf
    %v394 = vrot.slane %v386, 1
    %v395 = vrot.slane %v387, 1
    %v396 = vsel %vm200, %v394, %v395
    %v397 = vsel %vm200, %v395, %v394
    %v398 = vsel %vm119, %v396, -inf
    %v399 = vsel %vm120, %v397, -inf
    %v400 = vmax.f32 %v392, %v398
    %v401 = vmax.f32 %v393, %v399
    %v402 = vmax.f32 %v386, %v400
    %v403 = vmax.f32 %v387, %v401
    %v404 = vmul.f32 %v314, %v402
    %v405 = vmul.f32 %v329, %v403
    %v406 = vadd.f32 %v404, %v332
    %v407 = vadd.f32 %v405, %v333
    %v408 = vmax.f32 %v370, %v406
    %v409 = vmax.f32 %v371, %v407
    %410 = vrot.lane.b32.xlu0 %v408, 1
    %v411 = vpop.permute.xlu0 %410
    %412 = vrot.lane.b32.xlu0 %v409, 1
    %v413 = vpop.permute.xlu0 %412
    %v414 = vsel %vm115, %v411, -inf
    %v415 = vsel %vm115, %v413, -inf
    %416 = vrot.lane.b32.xlu0 %v408, 127
    %v417 = vpop.permute.xlu0 %416
    %418 = vrot.lane.b32.xlu0 %v409, 127
    %v419 = vpop.permute.xlu0 %418
    %v420 = vsel %vm116, %v417, -inf
    %v421 = vsel %vm116, %v419, -inf
    %v422 = vmax.f32 %v414, %v420
    %v423 = vmax.f32 %v415, %v421
    %v424 = vmax.f32 %v408, %v422
    %v425 = vmax.f32 %v409, %v423
    %v426 = vrot.slane %v424, 7
    %v427 = vrot.slane %v425, 7
    %v428 = vsel %vm191, %v426, %v427
    %v429 = vsel %vm191, %v427, %v426
    %v430 = vsel %vm117, %v429, -inf
    %v431 = vsel %vm118, %v428, -inf
    %v432 = vrot.slane %v424, 1
    %v433 = vrot.slane %v425, 1
    %v434 = vsel %vm200, %v432, %v433
    %v435 = vsel %vm200, %v433, %v432
    %v436 = vsel %vm119, %v434, -inf
    %v437 = vsel %vm120, %v435, -inf
    %v438 = vmax.f32 %v430, %v436
    %v439 = vmax.f32 %v431, %v437
    %v440 = vmax.f32 %v424, %v438
    %v441 = vmax.f32 %v425, %v439
    %v442 = vmul.f32 %v314, %v440
    %v443 = vmul.f32 %v329, %v441
    %v444 = vadd.f32 %v442, %v332
    %v445 = vadd.f32 %v443, %v333
    %v446 = vmax.f32 %v408, %v444
    %v447 = vmax.f32 %v409, %v445
    %448 = vrot.lane.b32.xlu0 %v446, 1
    %v449 = vpop.permute.xlu0 %448
    %450 = vrot.lane.b32.xlu0 %v447, 1
    %v451 = vpop.permute.xlu0 %450
    %v452 = vsel %vm115, %v449, -inf
    %v453 = vsel %vm115, %v451, -inf
    %454 = vrot.lane.b32.xlu0 %v446, 127
    %v455 = vpop.permute.xlu0 %454
    %456 = vrot.lane.b32.xlu0 %v447, 127
    %v457 = vpop.permute.xlu0 %456
    %v458 = vsel %vm116, %v455, -inf
    %v459 = vsel %vm116, %v457, -inf
    %v460 = vmax.f32 %v452, %v458
    %v461 = vmax.f32 %v453, %v459
    %v462 = vmax.f32 %v446, %v460
    %v463 = vmax.f32 %v447, %v461
    %v464 = vrot.slane %v462, 7
    %v465 = vrot.slane %v463, 7
    %v466 = vsel %vm191, %v464, %v465
    %v467 = vsel %vm191, %v465, %v464
    %v468 = vsel %vm117, %v467, -inf
    %v469 = vsel %vm118, %v466, -inf
    %v470 = vrot.slane %v462, 1
    %v471 = vrot.slane %v463, 1
    %v472 = vsel %vm200, %v470, %v471
    %v473 = vsel %vm200, %v471, %v470
    %v474 = vsel %vm119, %v472, -inf
    %v475 = vsel %vm120, %v473, -inf
    %v476 = vmax.f32 %v468, %v474
    %v477 = vmax.f32 %v469, %v475
    %v478 = vmax.f32 %v462, %v476
    %v479 = vmax.f32 %v463, %v477
    %v480 = vmul.f32 %v314, %v478
    %v481 = vmul.f32 %v329, %v479
    %v482 = vadd.f32 %v480, %v332
    %v483 = vadd.f32 %v481, %v333
    %v484 = vmax.f32 %v446, %v482
    %v485 = vmax.f32 %v447, %v483
    %486 = vrot.lane.b32.xlu0 %v484, 1
    %v487 = vpop.permute.xlu0 %486
    %488 = vrot.lane.b32.xlu0 %v485, 1
    %v489 = vpop.permute.xlu0 %488
    %v490 = vsel %vm115, %v487, -inf
    %v491 = vsel %vm115, %v489, -inf
    %492 = vrot.lane.b32.xlu0 %v484, 127
    %v493 = vpop.permute.xlu0 %492
    %494 = vrot.lane.b32.xlu0 %v485, 127
    %v495 = vpop.permute.xlu0 %494
    %v496 = vsel %vm116, %v493, -inf
    %v497 = vsel %vm116, %v495, -inf
    %v498 = vmax.f32 %v490, %v496
    %v499 = vmax.f32 %v491, %v497
    %v500 = vmax.f32 %v484, %v498
    %v501 = vmax.f32 %v485, %v499
    %v502 = vrot.slane %v500, 7
    %v503 = vrot.slane %v501, 7
    %v504 = vsel %vm191, %v502, %v503
    %v505 = vsel %vm191, %v503, %v502
    %v506 = vsel %vm117, %v505, -inf
    %v507 = vsel %vm118, %v504, -inf
    %v508 = vrot.slane %v500, 1
    %v509 = vrot.slane %v501, 1
    %v510 = vsel %vm200, %v508, %v509
    %v511 = vsel %vm200, %v509, %v508
    %v512 = vsel %vm119, %v510, -inf
    %v513 = vsel %vm120, %v511, -inf
    %v514 = vmax.f32 %v506, %v512
    %v515 = vmax.f32 %v507, %v513
    %v516 = vmax.f32 %v500, %v514
    %v517 = vmax.f32 %v501, %v515
    %v518 = vmul.f32 %v314, %v516
    %v519 = vmul.f32 %v329, %v517
    %v520 = vadd.f32 %v518, %v332
    %v521 = vadd.f32 %v519, %v333
    %v522 = vmax.f32 %v484, %v520
    %v523 = vmax.f32 %v485, %v521
    %524 = vrot.lane.b32.xlu0 %v522, 1
    %v525 = vpop.permute.xlu0 %524
    %526 = vrot.lane.b32.xlu0 %v523, 1
    %v527 = vpop.permute.xlu0 %526
    %v528 = vsel %vm115, %v525, -inf
    %v529 = vsel %vm115, %v527, -inf
    %530 = vrot.lane.b32.xlu0 %v522, 127
    %v531 = vpop.permute.xlu0 %530
    %532 = vrot.lane.b32.xlu0 %v523, 127
    %v533 = vpop.permute.xlu0 %532
    %v534 = vsel %vm116, %v531, -inf
    %v535 = vsel %vm116, %v533, -inf
    %v536 = vmax.f32 %v528, %v534
    %v537 = vmax.f32 %v529, %v535
    %v538 = vmax.f32 %v522, %v536
    %v539 = vmax.f32 %v523, %v537
    %v540 = vrot.slane %v538, 7
    %v541 = vrot.slane %v539, 7
    %v542 = vsel %vm191, %v540, %v541
    %v543 = vsel %vm191, %v541, %v540
    %v544 = vsel %vm117, %v543, -inf
    %v545 = vsel %vm118, %v542, -inf
    %v546 = vrot.slane %v538, 1
    %v547 = vrot.slane %v539, 1
    %v548 = vsel %vm200, %v546, %v547
    %v549 = vsel %vm200, %v547, %v546
    %v550 = vsel %vm119, %v548, -inf
    %v551 = vsel %vm120, %v549, -inf
    %v552 = vmax.f32 %v544, %v550
    %v553 = vmax.f32 %v545, %v551
    %v554 = vmax.f32 %v538, %v552
    %v555 = vmax.f32 %v539, %v553
    %v556 = vmul.f32 %v314, %v554
    %v557 = vmul.f32 %v329, %v555
    %v558 = vadd.f32 %v556, %v332
    %v559 = vadd.f32 %v557, %v333
    %v560 = vmax.f32 %v522, %v558
    %v561 = vmax.f32 %v523, %v559
    %562 = vrot.lane.b32.xlu0 %v560, 1
    %v563 = vpop.permute.xlu0 %562
    %564 = vrot.lane.b32.xlu0 %v561, 1
    %v565 = vpop.permute.xlu0 %564
    %v566 = vsel %vm115, %v563, -inf
    %v567 = vsel %vm115, %v565, -inf
    %568 = vrot.lane.b32.xlu0 %v560, 127
    %v569 = vpop.permute.xlu0 %568
    %570 = vrot.lane.b32.xlu0 %v561, 127
    %v571 = vpop.permute.xlu0 %570
    %v572 = vsel %vm116, %v569, -inf
    %v573 = vsel %vm116, %v571, -inf
    %v574 = vmax.f32 %v566, %v572
    %v575 = vmax.f32 %v567, %v573
    %v576 = vmax.f32 %v560, %v574
    %v577 = vmax.f32 %v561, %v575
    %v578 = vrot.slane %v576, 7
    %v579 = vrot.slane %v577, 7
    %v580 = vsel %vm191, %v578, %v579
    %v581 = vsel %vm191, %v579, %v578
    %v582 = vsel %vm117, %v581, -inf
    %v583 = vsel %vm118, %v580, -inf
    %v584 = vrot.slane %v576, 1
    %v585 = vrot.slane %v577, 1
    %v586 = vsel %vm200, %v584, %v585
    %v587 = vsel %vm200, %v585, %v584
    %v588 = vsel %vm119, %v586, -inf
    %v589 = vsel %vm120, %v587, -inf
    %v590 = vmax.f32 %v582, %v588
    %v591 = vmax.f32 %v583, %v589
    %v592 = vmax.f32 %v576, %v590
    %v593 = vmax.f32 %v577, %v591
    %v594 = vmul.f32 %v314, %v592
    %v595 = vmul.f32 %v329, %v593
    %v596 = vadd.f32 %v594, %v332
    %v597 = vadd.f32 %v595, %v333
    %v598 = vmax.f32 %v560, %v596
    %v599 = vmax.f32 %v561, %v597
    %600 = vrot.lane.b32.xlu0 %v598, 1
    %v601 = vpop.permute.xlu0 %600
    %602 = vrot.lane.b32.xlu0 %v599, 1
    %v603 = vpop.permute.xlu0 %602
    %v604 = vsel %vm115, %v601, -inf
    %v605 = vsel %vm115, %v603, -inf
    %606 = vrot.lane.b32.xlu0 %v598, 127
    %v607 = vpop.permute.xlu0 %606
    %608 = vrot.lane.b32.xlu0 %v599, 127
    %v609 = vpop.permute.xlu0 %608
    %v610 = vsel %vm116, %v607, -inf
    %v611 = vsel %vm116, %v609, -inf
    %v612 = vmax.f32 %v604, %v610
    %v613 = vmax.f32 %v605, %v611
    %v614 = vmax.f32 %v598, %v612
    %v615 = vmax.f32 %v599, %v613
    %v616 = vrot.slane %v614, 7
    %v617 = vrot.slane %v615, 7
    %v618 = vsel %vm191, %v616, %v617
    %v619 = vsel %vm191, %v617, %v616
    %v620 = vsel %vm117, %v619, -inf
    %v621 = vsel %vm118, %v618, -inf
    %v622 = vrot.slane %v614, 1
    %v623 = vrot.slane %v615, 1
    %v624 = vsel %vm200, %v622, %v623
    %v625 = vsel %vm200, %v623, %v622
    %v626 = vsel %vm119, %v624, -inf
    %v627 = vsel %vm120, %v625, -inf
    %v628 = vmax.f32 %v620, %v626
    %v629 = vmax.f32 %v621, %v627
    %v630 = vmax.f32 %v614, %v628
    %v631 = vmax.f32 %v615, %v629
    %v632 = vmul.f32 %v314, %v630
    %v633 = vmul.f32 %v329, %v631
    %v634 = vadd.f32 %v632, %v332
    %v635 = vadd.f32 %v633, %v333
    %v636 = vmax.f32 %v598, %v634
    %v637 = vmax.f32 %v599, %v635
    %638 = vrot.lane.b32.xlu0 %v636, 1
    %v639 = vpop.permute.xlu0 %638
    %640 = vrot.lane.b32.xlu0 %v637, 1
    %v641 = vpop.permute.xlu0 %640
    %v642 = vsel %vm115, %v639, -inf
    %v643 = vsel %vm115, %v641, -inf
    %644 = vrot.lane.b32.xlu0 %v636, 127
    %v645 = vpop.permute.xlu0 %644
    %646 = vrot.lane.b32.xlu0 %v637, 127
    %v647 = vpop.permute.xlu0 %646
    %v648 = vsel %vm116, %v645, -inf
    %v649 = vsel %vm116, %v647, -inf
    %v650 = vmax.f32 %v642, %v648
    %v651 = vmax.f32 %v643, %v649
    %v652 = vmax.f32 %v636, %v650
    %v653 = vmax.f32 %v637, %v651
    %v654 = vrot.slane %v652, 7
    %v655 = vrot.slane %v653, 7
    %v656 = vsel %vm191, %v654, %v655
    %v657 = vsel %vm191, %v655, %v654
    %v658 = vsel %vm117, %v657, -inf
    %v659 = vsel %vm118, %v656, -inf
    %v660 = vrot.slane %v652, 1
    %v661 = vrot.slane %v653, 1
    %v662 = vsel %vm200, %v660, %v661
    %v663 = vsel %vm200, %v661, %v660
    %v664 = vsel %vm119, %v662, -inf
    %v665 = vsel %vm120, %v663, -inf
    %v666 = vmax.f32 %v658, %v664
    %v667 = vmax.f32 %v659, %v665
    %v668 = vmax.f32 %v652, %v666
    %v669 = vmax.f32 %v653, %v667
    %v670 = vmul.f32 %v314, %v668
    %v671 = vmul.f32 %v329, %v669
    %v672 = vadd.f32 %v670, %v332
    %v673 = vadd.f32 %v671, %v333
    %v674 = vmax.f32 %v636, %v672
    %v675 = vmax.f32 %v637, %v673
    %676 = vrot.lane.b32.xlu0 %v674, 1
    %v677 = vpop.permute.xlu0 %676
    %678 = vrot.lane.b32.xlu0 %v675, 1
    %v679 = vpop.permute.xlu0 %678
    %v680 = vsel %vm115, %v677, -inf
    %v681 = vsel %vm115, %v679, -inf
    %682 = vrot.lane.b32.xlu0 %v674, 127
    %v683 = vpop.permute.xlu0 %682
    %684 = vrot.lane.b32.xlu0 %v675, 127
    %v685 = vpop.permute.xlu0 %684
    %v686 = vsel %vm116, %v683, -inf
    %v687 = vsel %vm116, %v685, -inf
    %v688 = vmax.f32 %v680, %v686
    %v689 = vmax.f32 %v681, %v687
    %v690 = vmax.f32 %v674, %v688
    %v691 = vmax.f32 %v675, %v689
    %v692 = vrot.slane %v690, 7
    %v693 = vrot.slane %v691, 7
    %v694 = vsel %vm191, %v692, %v693
    %v695 = vsel %vm191, %v693, %v692
    %v696 = vsel %vm117, %v695, -inf
    %v697 = vsel %vm118, %v694, -inf
    %v698 = vrot.slane %v690, 1
    %v699 = vrot.slane %v691, 1
    %v700 = vsel %vm200, %v698, %v699
    %v701 = vsel %vm200, %v699, %v698
    %v702 = vsel %vm119, %v700, -inf
    %v703 = vsel %vm120, %v701, -inf
    %v704 = vmax.f32 %v696, %v702
    %v705 = vmax.f32 %v697, %v703
    %v706 = vmax.f32 %v690, %v704
    %v707 = vmax.f32 %v691, %v705
    %v708 = vmul.f32 %v314, %v706
    %v709 = vmul.f32 %v329, %v707
    %v710 = vadd.f32 %v708, %v332
    %v711 = vadd.f32 %v709, %v333
    %v712 = vmax.f32 %v674, %v710
    %v713 = vmax.f32 %v675, %v711
    %714 = vrot.lane.b32.xlu0 %v712, 1
    %v715 = vpop.permute.xlu0 %714
    %716 = vrot.lane.b32.xlu0 %v713, 1
    %v717 = vpop.permute.xlu0 %716
    %v718 = vsel %vm115, %v715, -inf
    %v719 = vsel %vm115, %v717, -inf
    %720 = vrot.lane.b32.xlu0 %v712, 127
    %v721 = vpop.permute.xlu0 %720
    %722 = vrot.lane.b32.xlu0 %v713, 127
    %v723 = vpop.permute.xlu0 %722
    %v724 = vsel %vm116, %v721, -inf
    %v725 = vsel %vm116, %v723, -inf
    %v726 = vmax.f32 %v718, %v724
    %v727 = vmax.f32 %v719, %v725
    %v728 = vmax.f32 %v712, %v726
    %v729 = vmax.f32 %v713, %v727
    %v730 = vrot.slane %v728, 7
    %v731 = vrot.slane %v729, 7
    %v732 = vsel %vm191, %v730, %v731
    %v733 = vsel %vm191, %v731, %v730
    %v734 = vsel %vm117, %v733, -inf
    %v735 = vsel %vm118, %v732, -inf
    %v736 = vrot.slane %v728, 1
    %v737 = vrot.slane %v729, 1
    %v738 = vsel %vm200, %v736, %v737
    %v739 = vsel %vm200, %v737, %v736
    %v740 = vsel %vm119, %v738, -inf
    %v741 = vsel %vm120, %v739, -inf
    %v742 = vmax.f32 %v734, %v740
    %v743 = vmax.f32 %v735, %v741
    %v744 = vmax.f32 %v728, %v742
    %v745 = vmax.f32 %v729, %v743
    %v746 = vmul.f32 %v314, %v744
    %v747 = vmul.f32 %v329, %v745
    %v748 = vadd.f32 %v746, %v332
    %v749 = vadd.f32 %v747, %v333
    %v750 = vmax.f32 %v712, %v748
    %v751 = vmax.f32 %v713, %v749
    %752 = vrot.lane.b32.xlu0 %v750, 1
    %v753 = vpop.permute.xlu0 %752
    %754 = vrot.lane.b32.xlu0 %v751, 1
    %v755 = vpop.permute.xlu0 %754
    %v756 = vsel %vm115, %v753, -inf
    %v757 = vsel %vm115, %v755, -inf
    %758 = vrot.lane.b32.xlu0 %v750, 127
    %v759 = vpop.permute.xlu0 %758
    %760 = vrot.lane.b32.xlu0 %v751, 127
    %v761 = vpop.permute.xlu0 %760
    %v762 = vsel %vm116, %v759, -inf
    %v763 = vsel %vm116, %v761, -inf
    %v764 = vmax.f32 %v756, %v762
    %v765 = vmax.f32 %v757, %v763
    %v766 = vmax.f32 %v750, %v764
    %v767 = vmax.f32 %v751, %v765
    %v768 = vrot.slane %v766, 7
    %v769 = vrot.slane %v767, 7
    %v770 = vsel %vm191, %v768, %v769
    %v771 = vsel %vm191, %v769, %v768
    %v772 = vsel %vm117, %v771, -inf
    %v773 = vsel %vm118, %v770, -inf
    %v774 = vrot.slane %v766, 1
    %v775 = vrot.slane %v767, 1
    %v776 = vsel %vm200, %v774, %v775
    %v777 = vsel %vm200, %v775, %v774
    %v778 = vsel %vm119, %v776, -inf
    %v779 = vsel %vm120, %v777, -inf
    %v780 = vmax.f32 %v772, %v778
    %v781 = vmax.f32 %v773, %v779
    %v782 = vmax.f32 %v766, %v780
    %v783 = vmax.f32 %v767, %v781
    %v784 = vmul.f32 %v314, %v782
    %v785 = vmul.f32 %v329, %v783
    %v786 = vadd.f32 %v784, %v332
    %v787 = vadd.f32 %v785, %v333
    %v788 = vmax.f32 %v750, %v786
    %v789 = vmax.f32 %v751, %v787
    %790 = vrot.lane.b32.xlu0 %v788, 1
    %v791 = vpop.permute.xlu0 %790
    %792 = vrot.lane.b32.xlu0 %v789, 1
    %v793 = vpop.permute.xlu0 %792
    %v794 = vsel %vm115, %v791, -inf
    %v795 = vsel %vm115, %v793, -inf
    %796 = vrot.lane.b32.xlu0 %v788, 127
    %v797 = vpop.permute.xlu0 %796
    %798 = vrot.lane.b32.xlu0 %v789, 127
    %v799 = vpop.permute.xlu0 %798
    %v800 = vsel %vm116, %v797, -inf
    %v801 = vsel %vm116, %v799, -inf
    %v802 = vmax.f32 %v794, %v800
    %v803 = vmax.f32 %v795, %v801
    %v804 = vmax.f32 %v788, %v802
    %v805 = vmax.f32 %v789, %v803
    %v806 = vrot.slane %v804, 7
    %v807 = vrot.slane %v805, 7
    %v808 = vsel %vm191, %v806, %v807
    %v809 = vsel %vm191, %v807, %v806
    %v810 = vsel %vm117, %v809, -inf
    %v811 = vsel %vm118, %v808, -inf
    %v812 = vrot.slane %v804, 1
    %v813 = vrot.slane %v805, 1
    %v814 = vsel %vm200, %v812, %v813
    %v815 = vsel %vm200, %v813, %v812
    %v816 = vsel %vm119, %v814, -inf
    %v817 = vsel %vm120, %v815, -inf
    %v818 = vmax.f32 %v810, %v816
    %v819 = vmax.f32 %v811, %v817
    %v820 = vmax.f32 %v804, %v818
    %v821 = vmax.f32 %v805, %v819
    %v822 = vmul.f32 %v314, %v820
    %v823 = vmul.f32 %v329, %v821
    %v824 = vadd.f32 %v822, %v332
    %v825 = vadd.f32 %v823, %v333
    %v826 = vmax.f32 %v788, %v824
    %v827 = vmax.f32 %v789, %v825
    %828 = vrot.lane.b32.xlu0 %v826, 1
    %v829 = vpop.permute.xlu0 %828
    %830 = vrot.lane.b32.xlu0 %v827, 1
    %v831 = vpop.permute.xlu0 %830
    %v832 = vsel %vm115, %v829, -inf
    %v833 = vsel %vm115, %v831, -inf
    %834 = vrot.lane.b32.xlu0 %v826, 127
    %v835 = vpop.permute.xlu0 %834
    %836 = vrot.lane.b32.xlu0 %v827, 127
    %v837 = vpop.permute.xlu0 %836
    %v838 = vsel %vm116, %v835, -inf
    %v839 = vsel %vm116, %v837, -inf
    %v840 = vmax.f32 %v832, %v838
    %v841 = vmax.f32 %v833, %v839
    %v842 = vmax.f32 %v826, %v840
    %v843 = vmax.f32 %v827, %v841
    %v844 = vrot.slane %v842, 7
    %v845 = vrot.slane %v843, 7
    %v846 = vsel %vm191, %v844, %v845
    %v847 = vsel %vm191, %v845, %v844
    %v848 = vsel %vm117, %v847, -inf
    %v849 = vsel %vm118, %v846, -inf
    %v850 = vrot.slane %v842, 1
    %v851 = vrot.slane %v843, 1
    %v852 = vsel %vm200, %v850, %v851
    %v853 = vsel %vm200, %v851, %v850
    %v854 = vsel %vm119, %v852, -inf
    %v855 = vsel %vm120, %v853, -inf
    %v856 = vmax.f32 %v848, %v854
    %v857 = vmax.f32 %v849, %v855
    %v858 = vmax.f32 %v842, %v856
    %v859 = vmax.f32 %v843, %v857
    %v860 = vmul.f32 %v314, %v858
    %v861 = vmul.f32 %v329, %v859
    %v862 = vadd.f32 %v860, %v332
    %v863 = vadd.f32 %v861, %v333
    %v864 = vmax.f32 %v826, %v862
    %v865 = vmax.f32 %v827, %v863
    %866 = vrot.lane.b32.xlu0 %v864, 1
    %v867 = vpop.permute.xlu0 %866
    %868 = vrot.lane.b32.xlu0 %v865, 1
    %v869 = vpop.permute.xlu0 %868
    %v870 = vsel %vm115, %v867, -inf
    %v871 = vsel %vm115, %v869, -inf
    %872 = vrot.lane.b32.xlu0 %v864, 127
    %v873 = vpop.permute.xlu0 %872
    %874 = vrot.lane.b32.xlu0 %v865, 127
    %v875 = vpop.permute.xlu0 %874
    %v876 = vsel %vm116, %v873, -inf
    %v877 = vsel %vm116, %v875, -inf
    %v878 = vmax.f32 %v870, %v876
    %v879 = vmax.f32 %v871, %v877
    %v880 = vmax.f32 %v864, %v878
    %v881 = vmax.f32 %v865, %v879
    %v882 = vrot.slane %v880, 7
    %v883 = vrot.slane %v881, 7
    %v884 = vsel %vm191, %v882, %v883
    %v885 = vsel %vm191, %v883, %v882
    %v886 = vsel %vm117, %v885, -inf
    %v887 = vsel %vm118, %v884, -inf
    %v888 = vrot.slane %v880, 1
    %v889 = vrot.slane %v881, 1
    %v890 = vsel %vm200, %v888, %v889
    %v891 = vsel %vm200, %v889, %v888
    %v892 = vsel %vm119, %v890, -inf
    %v893 = vsel %vm120, %v891, -inf
    %v894 = vmax.f32 %v886, %v892
    %v895 = vmax.f32 %v887, %v893
    %v896 = vmax.f32 %v880, %v894
    %v897 = vmax.f32 %v881, %v895
    %v898 = vmul.f32 %v314, %v896
    %v899 = vmul.f32 %v329, %v897
    %v900 = vadd.f32 %v898, %v332
    %v901 = vadd.f32 %v899, %v333
    %v902 = vmax.f32 %v864, %v900
    %v903 = vmax.f32 %v865, %v901
    %904 = vrot.lane.b32.xlu0 %v902, 1
    %v905 = vpop.permute.xlu0 %904
    %906 = vrot.lane.b32.xlu0 %v903, 1
    %v907 = vpop.permute.xlu0 %906
    %v908 = vsel %vm115, %v905, -inf
    %v909 = vsel %vm115, %v907, -inf
    %910 = vrot.lane.b32.xlu0 %v902, 127
    %v911 = vpop.permute.xlu0 %910
    %912 = vrot.lane.b32.xlu0 %v903, 127
    %v913 = vpop.permute.xlu0 %912
    %v914 = vsel %vm116, %v911, -inf
    %v915 = vsel %vm116, %v913, -inf
    %v916 = vmax.f32 %v908, %v914
    %v917 = vmax.f32 %v909, %v915
    %v918 = vmax.f32 %v902, %v916
    %v919 = vmax.f32 %v903, %v917
    %v920 = vrot.slane %v918, 7
    %v921 = vrot.slane %v919, 7
    %v922 = vsel %vm191, %v920, %v921
    %v923 = vsel %vm191, %v921, %v920
    %v924 = vsel %vm117, %v923, -inf
    %v925 = vsel %vm118, %v922, -inf
    %v926 = vrot.slane %v918, 1
    %v927 = vrot.slane %v919, 1
    %v928 = vsel %vm200, %v926, %v927
    %v929 = vsel %vm200, %v927, %v926
    %v930 = vsel %vm119, %v928, -inf
    %v931 = vsel %vm120, %v929, -inf
    %v932 = vmax.f32 %v924, %v930
    %v933 = vmax.f32 %v925, %v931
    %v934 = vmax.f32 %v918, %v932
    %v935 = vmax.f32 %v919, %v933
    %v936 = vmul.f32 %v314, %v934
    %v937 = vmul.f32 %v329, %v935
    %v938 = vadd.f32 %v936, %v332
    %v939 = vadd.f32 %v937, %v333
    %v940 = vmax.f32 %v902, %v938
    %v941 = vmax.f32 %v903, %v939
    %942 = vrot.lane.b32.xlu0 %v940, 1
    %v943 = vpop.permute.xlu0 %942
    %944 = vrot.lane.b32.xlu0 %v941, 1
    %v945 = vpop.permute.xlu0 %944
    %v946 = vsel %vm115, %v943, -inf
    %v947 = vsel %vm115, %v945, -inf
    %948 = vrot.lane.b32.xlu0 %v940, 127
    %v949 = vpop.permute.xlu0 %948
    %950 = vrot.lane.b32.xlu0 %v941, 127
    %v951 = vpop.permute.xlu0 %950
    %v952 = vsel %vm116, %v949, -inf
    %v953 = vsel %vm116, %v951, -inf
    %v954 = vmax.f32 %v946, %v952
    %v955 = vmax.f32 %v947, %v953
    %v956 = vmax.f32 %v940, %v954
    %v957 = vmax.f32 %v941, %v955
    %v958 = vrot.slane %v956, 7
    %v959 = vrot.slane %v957, 7
    %v960 = vsel %vm191, %v958, %v959
    %v961 = vsel %vm191, %v959, %v958
    %v962 = vsel %vm117, %v961, -inf
    %v963 = vsel %vm118, %v960, -inf
    %v964 = vrot.slane %v956, 1
    %v965 = vrot.slane %v957, 1
    %v966 = vsel %vm200, %v964, %v965
    %v967 = vsel %vm200, %v965, %v964
    %v968 = vsel %vm119, %v966, -inf
    %v969 = vsel %vm120, %v967, -inf
    %v970 = vmax.f32 %v962, %v968
    %v971 = vmax.f32 %v963, %v969
    %v972 = vmax.f32 %v956, %v970
    %v973 = vmax.f32 %v957, %v971
    %v974 = vmul.f32 %v314, %v972
    %v975 = vmul.f32 %v329, %v973
    %v976 = vadd.f32 %v974, %v332
    %v977 = vadd.f32 %v975, %v333
    %v978 = vmax.f32 %v940, %v976
    %v979 = vmax.f32 %v941, %v977
    %980 = vrot.lane.b32.xlu0 %v978, 1
    %v981 = vpop.permute.xlu0 %980
    %982 = vrot.lane.b32.xlu0 %v979, 1
    %v983 = vpop.permute.xlu0 %982
    %v984 = vsel %vm115, %v981, -inf
    %v985 = vsel %vm115, %v983, -inf
    %986 = vrot.lane.b32.xlu0 %v978, 127
    %v987 = vpop.permute.xlu0 %986
    %988 = vrot.lane.b32.xlu0 %v979, 127
    %v989 = vpop.permute.xlu0 %988
    %v990 = vsel %vm116, %v987, -inf
    %v991 = vsel %vm116, %v989, -inf
    %v992 = vmax.f32 %v984, %v990
    %v993 = vmax.f32 %v985, %v991
    %v994 = vmax.f32 %v978, %v992
    %v995 = vmax.f32 %v979, %v993
    %v996 = vrot.slane %v994, 7
    %v997 = vrot.slane %v995, 7
    %v998 = vsel %vm191, %v996, %v997
    %v999 = vsel %vm191, %v997, %v996
    %v1000 = vsel %vm117, %v999, -inf
    %v1001 = vsel %vm118, %v998, -inf
    %v1002 = vrot.slane %v994, 1
    %v1003 = vrot.slane %v995, 1
    %v1004 = vsel %vm200, %v1002, %v1003
    %v1005 = vsel %vm200, %v1003, %v1002
    %v1006 = vsel %vm119, %v1004, -inf
    %v1007 = vsel %vm120, %v1005, -inf
    %v1008 = vmax.f32 %v1000, %v1006
    %v1009 = vmax.f32 %v1001, %v1007
    %v1010 = vmax.f32 %v994, %v1008
    %v1011 = vmax.f32 %v995, %v1009
    %v1012 = vmul.f32 %v314, %v1010
    %v1013 = vmul.f32 %v329, %v1011
    %v1014 = vadd.f32 %v1012, %v332
    %v1015 = vadd.f32 %v1013, %v333
    %v1016 = vmax.f32 %v978, %v1014
    %v1017 = vmax.f32 %v979, %v1015
    %1018 = vrot.lane.b32.xlu0 %v1016, 1
    %v1019 = vpop.permute.xlu0 %1018
    %1020 = vrot.lane.b32.xlu0 %v1017, 1
    %v1021 = vpop.permute.xlu0 %1020
    %v1022 = vsel %vm115, %v1019, -inf
    %v1023 = vsel %vm115, %v1021, -inf
    %1024 = vrot.lane.b32.xlu0 %v1016, 127
    %v1025 = vpop.permute.xlu0 %1024
    %1026 = vrot.lane.b32.xlu0 %v1017, 127
    %v1027 = vpop.permute.xlu0 %1026
    %v1028 = vsel %vm116, %v1025, -inf
    %v1029 = vsel %vm116, %v1027, -inf
    %v1030 = vmax.f32 %v1022, %v1028
    %v1031 = vmax.f32 %v1023, %v1029
    %v1032 = vmax.f32 %v1016, %v1030
    %v1033 = vmax.f32 %v1017, %v1031
    %v1034 = vrot.slane %v1032, 7
    %v1035 = vrot.slane %v1033, 7
    %v1036 = vsel %vm191, %v1034, %v1035
    %v1037 = vsel %vm191, %v1035, %v1034
    %v1038 = vsel %vm117, %v1037, -inf
    %v1039 = vsel %vm118, %v1036, -inf
    %v1040 = vrot.slane %v1032, 1
    %v1041 = vrot.slane %v1033, 1
    %v1042 = vsel %vm200, %v1040, %v1041
    %v1043 = vsel %vm200, %v1041, %v1040
    %v1044 = vsel %vm119, %v1042, -inf
    %v1045 = vsel %vm120, %v1043, -inf
    %v1046 = vmax.f32 %v1038, %v1044
    %v1047 = vmax.f32 %v1039, %v1045
    %v1048 = vmax.f32 %v1032, %v1046
    %v1049 = vmax.f32 %v1033, %v1047
    %v1050 = vmul.f32 %v314, %v1048
    %v1051 = vmul.f32 %v329, %v1049
    %v1052 = vadd.f32 %v1050, %v332
    %v1053 = vadd.f32 %v1051, %v333
    %v1054 = vmax.f32 %v1016, %v1052
    %v1055 = vmax.f32 %v1017, %v1053
    %1056 = vrot.lane.b32.xlu0 %v1054, 1
    %v1057 = vpop.permute.xlu0 %1056
    %1058 = vrot.lane.b32.xlu0 %v1055, 1
    %v1059 = vpop.permute.xlu0 %1058
    %v1060 = vsel %vm115, %v1057, -inf
    %v1061 = vsel %vm115, %v1059, -inf
    %1062 = vrot.lane.b32.xlu0 %v1054, 127
    %v1063 = vpop.permute.xlu0 %1062
    %1064 = vrot.lane.b32.xlu0 %v1055, 127
    %v1065 = vpop.permute.xlu0 %1064
    %v1066 = vsel %vm116, %v1063, -inf
    %v1067 = vsel %vm116, %v1065, -inf
    %v1068 = vmax.f32 %v1060, %v1066
    %v1069 = vmax.f32 %v1061, %v1067
    %v1070 = vmax.f32 %v1054, %v1068
    %v1071 = vmax.f32 %v1055, %v1069
    %v1072 = vrot.slane %v1070, 7
    %v1073 = vrot.slane %v1071, 7
    %v1074 = vsel %vm191, %v1072, %v1073
    %v1075 = vsel %vm191, %v1073, %v1072
    %v1076 = vsel %vm117, %v1075, -inf
    %v1077 = vsel %vm118, %v1074, -inf
    %v1078 = vrot.slane %v1070, 1
    %v1079 = vrot.slane %v1071, 1
    %v1080 = vsel %vm200, %v1078, %v1079
    %v1081 = vsel %vm200, %v1079, %v1078
    %v1082 = vsel %vm119, %v1080, -inf
    %v1083 = vsel %vm120, %v1081, -inf
    %v1084 = vmax.f32 %v1076, %v1082
    %v1085 = vmax.f32 %v1077, %v1083
    %v1086 = vmax.f32 %v1070, %v1084
    %v1087 = vmax.f32 %v1071, %v1085
    %v1088 = vmul.f32 %v314, %v1086
    %v1089 = vmul.f32 %v329, %v1087
    %v1090 = vadd.f32 %v1088, %v332
    %v1091 = vadd.f32 %v1089, %v333
    %v1092 = vmax.f32 %v1054, %v1090
    %v1093 = vmax.f32 %v1055, %v1091
    %1094 = vrot.lane.b32.xlu0 %v1092, 1
    %v1095 = vpop.permute.xlu0 %1094
    %1096 = vrot.lane.b32.xlu0 %v1093, 1
    %v1097 = vpop.permute.xlu0 %1096
    %v1098 = vsel %vm115, %v1095, -inf
    %v1099 = vsel %vm115, %v1097, -inf
    %1100 = vrot.lane.b32.xlu0 %v1092, 127
    %v1101 = vpop.permute.xlu0 %1100
    %1102 = vrot.lane.b32.xlu0 %v1093, 127
    %v1103 = vpop.permute.xlu0 %1102
    %v1104 = vsel %vm116, %v1101, -inf
    %v1105 = vsel %vm116, %v1103, -inf
    %v1106 = vmax.f32 %v1098, %v1104
    %v1107 = vmax.f32 %v1099, %v1105
    %v1108 = vmax.f32 %v1092, %v1106
    %v1109 = vmax.f32 %v1093, %v1107
    %v1110 = vrot.slane %v1108, 7
    %v1111 = vrot.slane %v1109, 7
    %v1112 = vsel %vm191, %v1110, %v1111
    %v1113 = vsel %vm191, %v1111, %v1110
    %v1114 = vsel %vm117, %v1113, -inf
    %v1115 = vsel %vm118, %v1112, -inf
    %v1116 = vrot.slane %v1108, 1
    %v1117 = vrot.slane %v1109, 1
    %v1118 = vsel %vm200, %v1116, %v1117
    %v1119 = vsel %vm200, %v1117, %v1116
    %v1120 = vsel %vm119, %v1118, -inf
    %v1121 = vsel %vm120, %v1119, -inf
    %v1122 = vmax.f32 %v1114, %v1120
    %v1123 = vmax.f32 %v1115, %v1121
    %v1124 = vmax.f32 %v1108, %v1122
    %v1125 = vmax.f32 %v1109, %v1123
    %v1126 = vmul.f32 %v314, %v1124
    %v1127 = vmul.f32 %v329, %v1125
    %v1128 = vadd.f32 %v1126, %v332
    %v1129 = vadd.f32 %v1127, %v333
    %v1130 = vmax.f32 %v1092, %v1128
    %v1131 = vmax.f32 %v1093, %v1129
    %1132 = vrot.lane.b32.xlu0 %v1130, 1
    %v1133 = vpop.permute.xlu0 %1132
    %1134 = vrot.lane.b32.xlu0 %v1131, 1
    %v1135 = vpop.permute.xlu0 %1134
    %v1136 = vsel %vm115, %v1133, -inf
    %v1137 = vsel %vm115, %v1135, -inf
    %1138 = vrot.lane.b32.xlu0 %v1130, 127
    %v1139 = vpop.permute.xlu0 %1138
    %1140 = vrot.lane.b32.xlu0 %v1131, 127
    %v1141 = vpop.permute.xlu0 %1140
    %v1142 = vsel %vm116, %v1139, -inf
    %v1143 = vsel %vm116, %v1141, -inf
    %v1144 = vmax.f32 %v1136, %v1142
    %v1145 = vmax.f32 %v1137, %v1143
    %v1146 = vmax.f32 %v1130, %v1144
    %v1147 = vmax.f32 %v1131, %v1145
    %v1148 = vrot.slane %v1146, 7
    %v1149 = vrot.slane %v1147, 7
    %v1150 = vsel %vm191, %v1148, %v1149
    %v1151 = vsel %vm191, %v1149, %v1148
    %v1152 = vsel %vm117, %v1151, -inf
    %v1153 = vsel %vm118, %v1150, -inf
    %v1154 = vrot.slane %v1146, 1
    %v1155 = vrot.slane %v1147, 1
    %v1156 = vsel %vm200, %v1154, %v1155
    %v1157 = vsel %vm200, %v1155, %v1154
    %v1158 = vsel %vm119, %v1156, -inf
    %v1159 = vsel %vm120, %v1157, -inf
    %v1160 = vmax.f32 %v1152, %v1158
    %v1161 = vmax.f32 %v1153, %v1159
    %v1162 = vmax.f32 %v1146, %v1160
    %v1163 = vmax.f32 %v1147, %v1161
    %v1164 = vmul.f32 %v314, %v1162
    %v1165 = vmul.f32 %v329, %v1163
    %v1166 = vadd.f32 %v1164, %v332
    %v1167 = vadd.f32 %v1165, %v333
    %v1168 = vmax.f32 %v1130, %v1166
    %v1169 = vmax.f32 %v1131, %v1167
    %1170 = vrot.lane.b32.xlu0 %v1168, 1
    %v1171 = vpop.permute.xlu0 %1170
    %1172 = vrot.lane.b32.xlu0 %v1169, 1
    %v1173 = vpop.permute.xlu0 %1172
    %v1174 = vsel %vm115, %v1171, -inf
    %v1175 = vsel %vm115, %v1173, -inf
    %1176 = vrot.lane.b32.xlu0 %v1168, 127
    %v1177 = vpop.permute.xlu0 %1176
    %1178 = vrot.lane.b32.xlu0 %v1169, 127
    %v1179 = vpop.permute.xlu0 %1178
    %v1180 = vsel %vm116, %v1177, -inf
    %v1181 = vsel %vm116, %v1179, -inf
    %v1182 = vmax.f32 %v1174, %v1180
    %v1183 = vmax.f32 %v1175, %v1181
    %v1184 = vmax.f32 %v1168, %v1182
    %v1185 = vmax.f32 %v1169, %v1183
    %v1186 = vrot.slane %v1184, 7
    %v1187 = vrot.slane %v1185, 7
    %v1188 = vsel %vm191, %v1186, %v1187
    %v1189 = vsel %vm191, %v1187, %v1186
    %v1190 = vsel %vm117, %v1189, -inf
    %v1191 = vsel %vm118, %v1188, -inf
    %v1192 = vrot.slane %v1184, 1
    %v1193 = vrot.slane %v1185, 1
    %v1194 = vsel %vm200, %v1192, %v1193
    %v1195 = vsel %vm200, %v1193, %v1192
    %v1196 = vsel %vm119, %v1194, -inf
    %v1197 = vsel %vm120, %v1195, -inf
    %v1198 = vmax.f32 %v1190, %v1196
    %v1199 = vmax.f32 %v1191, %v1197
    %v1200 = vmax.f32 %v1184, %v1198
    %v1201 = vmax.f32 %v1185, %v1199
    %v1202 = vmul.f32 %v314, %v1200
    %v1203 = vmul.f32 %v329, %v1201
    %v1204 = vadd.f32 %v1202, %v332
    %v1205 = vadd.f32 %v1203, %v333
    %v1206 = vmax.f32 %v1168, %v1204
    %v1207 = vmax.f32 %v1169, %v1205
    %1208 = vrot.lane.b32.xlu0 %v1206, 1
    %v1209 = vpop.permute.xlu0 %1208
    %1210 = vrot.lane.b32.xlu0 %v1207, 1
    %v1211 = vpop.permute.xlu0 %1210
    %v1212 = vsel %vm115, %v1209, -inf
    %v1213 = vsel %vm115, %v1211, -inf
    %1214 = vrot.lane.b32.xlu0 %v1206, 127
    %v1215 = vpop.permute.xlu0 %1214
    %1216 = vrot.lane.b32.xlu0 %v1207, 127
    %v1217 = vpop.permute.xlu0 %1216
    %v1218 = vsel %vm116, %v1215, -inf
    %v1219 = vsel %vm116, %v1217, -inf
    %v1220 = vmax.f32 %v1212, %v1218
    %v1221 = vmax.f32 %v1213, %v1219
    %v1222 = vmax.f32 %v1206, %v1220
    %v1223 = vmax.f32 %v1207, %v1221
    %v1224 = vrot.slane %v1222, 7
    %v1225 = vrot.slane %v1223, 7
    %v1226 = vsel %vm191, %v1224, %v1225
    %v1227 = vsel %vm191, %v1225, %v1224
    %v1228 = vsel %vm117, %v1227, -inf
    %v1229 = vsel %vm118, %v1226, -inf
    %v1230 = vrot.slane %v1222, 1
    %v1231 = vrot.slane %v1223, 1
    %v1232 = vsel %vm200, %v1230, %v1231
    %v1233 = vsel %vm200, %v1231, %v1230
    %v1234 = vsel %vm119, %v1232, -inf
    %v1235 = vsel %vm120, %v1233, -inf
    %v1236 = vmax.f32 %v1228, %v1234
    %v1237 = vmax.f32 %v1229, %v1235
    %v1238 = vmax.f32 %v1222, %v1236
    %v1239 = vmax.f32 %v1223, %v1237
    %v1240 = vmul.f32 %v314, %v1238
    %v1241 = vmul.f32 %v329, %v1239
    %v1242 = vadd.f32 %v1240, %v332
    %v1243 = vadd.f32 %v1241, %v333
    %v1244 = vmax.f32 %v1206, %v1242
    %v1245 = vmax.f32 %v1207, %v1243
    %1246 = vrot.lane.b32.xlu0 %v1244, 1
    %v1247 = vpop.permute.xlu0 %1246
    %1248 = vrot.lane.b32.xlu0 %v1245, 1
    %v1249 = vpop.permute.xlu0 %1248
    %v1250 = vsel %vm115, %v1247, -inf
    %v1251 = vsel %vm115, %v1249, -inf
    %1252 = vrot.lane.b32.xlu0 %v1244, 127
    %v1253 = vpop.permute.xlu0 %1252
    %1254 = vrot.lane.b32.xlu0 %v1245, 127
    %v1255 = vpop.permute.xlu0 %1254
    %v1256 = vsel %vm116, %v1253, -inf
    %v1257 = vsel %vm116, %v1255, -inf
    %v1258 = vmax.f32 %v1250, %v1256
    %v1259 = vmax.f32 %v1251, %v1257
    %v1260 = vmax.f32 %v1244, %v1258
    %v1261 = vmax.f32 %v1245, %v1259
    %v1262 = vrot.slane %v1260, 7
    %v1263 = vrot.slane %v1261, 7
    %v1264 = vsel %vm191, %v1262, %v1263
    %v1265 = vsel %vm191, %v1263, %v1262
    %v1266 = vsel %vm117, %v1265, -inf
    %v1267 = vsel %vm118, %v1264, -inf
    %v1268 = vrot.slane %v1260, 1
    %v1269 = vrot.slane %v1261, 1
    %v1270 = vsel %vm200, %v1268, %v1269
    %v1271 = vsel %vm200, %v1269, %v1268
    %v1272 = vsel %vm119, %v1270, -inf
    %v1273 = vsel %vm120, %v1271, -inf
    %v1274 = vmax.f32 %v1266, %v1272
    %v1275 = vmax.f32 %v1267, %v1273
    %v1276 = vmax.f32 %v1260, %v1274
    %v1277 = vmax.f32 %v1261, %v1275
    %v1278 = vmul.f32 %v314, %v1276
    %v1279 = vmul.f32 %v329, %v1277
    %v1280 = vadd.f32 %v1278, %v332
    %v1281 = vadd.f32 %v1279, %v333
    %v1282 = vmax.f32 %v1244, %v1280
    %v1283 = vmax.f32 %v1245, %v1281
    %1284 = vrot.lane.b32.xlu0 %v1282, 1
    %v1285 = vpop.permute.xlu0 %1284
    %1286 = vrot.lane.b32.xlu0 %v1283, 1
    %v1287 = vpop.permute.xlu0 %1286
    %v1288 = vsel %vm115, %v1285, -inf
    %v1289 = vsel %vm115, %v1287, -inf
    %1290 = vrot.lane.b32.xlu0 %v1282, 127
    %v1291 = vpop.permute.xlu0 %1290
    %1292 = vrot.lane.b32.xlu0 %v1283, 127
    %v1293 = vpop.permute.xlu0 %1292
    %v1294 = vsel %vm116, %v1291, -inf
    %v1295 = vsel %vm116, %v1293, -inf
    %v1296 = vmax.f32 %v1288, %v1294
    %v1297 = vmax.f32 %v1289, %v1295
    %v1298 = vmax.f32 %v1282, %v1296
    %v1299 = vmax.f32 %v1283, %v1297
    %v1300 = vrot.slane %v1298, 7
    %v1301 = vrot.slane %v1299, 7
    %v1302 = vsel %vm191, %v1300, %v1301
    %v1303 = vsel %vm191, %v1301, %v1300
    %v1304 = vsel %vm117, %v1303, -inf
    %v1305 = vsel %vm118, %v1302, -inf
    %v1306 = vrot.slane %v1298, 1
    %v1307 = vrot.slane %v1299, 1
    %v1308 = vsel %vm200, %v1306, %v1307
    %v1309 = vsel %vm200, %v1307, %v1306
    %v1310 = vsel %vm119, %v1308, -inf
    %v1311 = vsel %vm120, %v1309, -inf
    %v1312 = vmax.f32 %v1304, %v1310
    %v1313 = vmax.f32 %v1305, %v1311
    %v1314 = vmax.f32 %v1298, %v1312
    %v1315 = vmax.f32 %v1299, %v1313
    %v1316 = vmul.f32 %v314, %v1314
    %v1317 = vmul.f32 %v329, %v1315
    %v1318 = vadd.f32 %v1316, %v332
    %v1319 = vadd.f32 %v1317, %v333
    %v1320 = vmax.f32 %v1282, %v1318
    %v1321 = vmax.f32 %v1283, %v1319
    %1322 = vrot.lane.b32.xlu0 %v1320, 1
    %v1323 = vpop.permute.xlu0 %1322
    %1324 = vrot.lane.b32.xlu0 %v1321, 1
    %v1325 = vpop.permute.xlu0 %1324
    %v1326 = vsel %vm115, %v1323, -inf
    %v1327 = vsel %vm115, %v1325, -inf
    %1328 = vrot.lane.b32.xlu0 %v1320, 127
    %v1329 = vpop.permute.xlu0 %1328
    %1330 = vrot.lane.b32.xlu0 %v1321, 127
    %v1331 = vpop.permute.xlu0 %1330
    %v1332 = vsel %vm116, %v1329, -inf
    %v1333 = vsel %vm116, %v1331, -inf
    %v1334 = vmax.f32 %v1326, %v1332
    %v1335 = vmax.f32 %v1327, %v1333
    %v1336 = vmax.f32 %v1320, %v1334
    %v1337 = vmax.f32 %v1321, %v1335
    %v1338 = vrot.slane %v1336, 7
    %v1339 = vrot.slane %v1337, 7
    %v1340 = vsel %vm191, %v1338, %v1339
    %v1341 = vsel %vm191, %v1339, %v1338
    %v1342 = vsel %vm117, %v1341, -inf
    %v1343 = vsel %vm118, %v1340, -inf
    %v1344 = vrot.slane %v1336, 1
    %v1345 = vrot.slane %v1337, 1
    %v1346 = vsel %vm200, %v1344, %v1345
    %v1347 = vsel %vm200, %v1345, %v1344
    %v1348 = vsel %vm119, %v1346, -inf
    %v1349 = vsel %vm120, %v1347, -inf
    %v1350 = vmax.f32 %v1342, %v1348
    %v1351 = vmax.f32 %v1343, %v1349
    %v1352 = vmax.f32 %v1336, %v1350
    %v1353 = vmax.f32 %v1337, %v1351
    %v1354 = vmul.f32 %v314, %v1352
    %v1355 = vmul.f32 %v329, %v1353
    %v1356 = vadd.f32 %v1354, %v332
    %v1357 = vadd.f32 %v1355, %v333
    %v1358 = vmax.f32 %v1320, %v1356
    %v1359 = vmax.f32 %v1321, %v1357
    %1360 = vrot.lane.b32.xlu0 %v1358, 1
    %v1361 = vpop.permute.xlu0 %1360
    %1362 = vrot.lane.b32.xlu0 %v1359, 1
    %v1363 = vpop.permute.xlu0 %1362
    %v1364 = vsel %vm115, %v1361, -inf
    %v1365 = vsel %vm115, %v1363, -inf
    %1366 = vrot.lane.b32.xlu0 %v1358, 127
    %v1367 = vpop.permute.xlu0 %1366
    %1368 = vrot.lane.b32.xlu0 %v1359, 127
    %v1369 = vpop.permute.xlu0 %1368
    %v1370 = vsel %vm116, %v1367, -inf
    %v1371 = vsel %vm116, %v1369, -inf
    %v1372 = vmax.f32 %v1364, %v1370
    %v1373 = vmax.f32 %v1365, %v1371
    %v1374 = vmax.f32 %v1358, %v1372
    %v1375 = vmax.f32 %v1359, %v1373
    %v1376 = vrot.slane %v1374, 7
    %v1377 = vrot.slane %v1375, 7
    %v1378 = vsel %vm191, %v1376, %v1377
    %v1379 = vsel %vm191, %v1377, %v1376
    %v1380 = vsel %vm117, %v1379, -inf
    %v1381 = vsel %vm118, %v1378, -inf
    %v1382 = vrot.slane %v1374, 1
    %v1383 = vrot.slane %v1375, 1
    %v1384 = vsel %vm200, %v1382, %v1383
    %v1385 = vsel %vm200, %v1383, %v1382
    %v1386 = vsel %vm119, %v1384, -inf
    %v1387 = vsel %vm120, %v1385, -inf
    %v1388 = vmax.f32 %v1380, %v1386
    %v1389 = vmax.f32 %v1381, %v1387
    %v1390 = vmax.f32 %v1374, %v1388
    %v1391 = vmax.f32 %v1375, %v1389
    %v1392 = vmul.f32 %v314, %v1390
    %v1393 = vmul.f32 %v329, %v1391
    %v1394 = vadd.f32 %v1392, %v332
    %v1395 = vadd.f32 %v1393, %v333
    %v1396 = vmax.f32 %v1358, %v1394
    %v1397 = vmax.f32 %v1359, %v1395
    %1398 = vrot.lane.b32.xlu0 %v1396, 1
    %v1399 = vpop.permute.xlu0 %1398
    %1400 = vrot.lane.b32.xlu0 %v1397, 1
    %v1401 = vpop.permute.xlu0 %1400
    %v1402 = vsel %vm115, %v1399, -inf
    %v1403 = vsel %vm115, %v1401, -inf
    %1404 = vrot.lane.b32.xlu0 %v1396, 127
    %v1405 = vpop.permute.xlu0 %1404
    %1406 = vrot.lane.b32.xlu0 %v1397, 127
    %v1407 = vpop.permute.xlu0 %1406
    %v1408 = vsel %vm116, %v1405, -inf
    %v1409 = vsel %vm116, %v1407, -inf
    %v1410 = vmax.f32 %v1402, %v1408
    %v1411 = vmax.f32 %v1403, %v1409
    %v1412 = vmax.f32 %v1396, %v1410
    %v1413 = vmax.f32 %v1397, %v1411
    %v1414 = vrot.slane %v1412, 7
    %v1415 = vrot.slane %v1413, 7
    %v1416 = vsel %vm191, %v1414, %v1415
    %v1417 = vsel %vm191, %v1415, %v1414
    %v1418 = vsel %vm117, %v1417, -inf
    %v1419 = vsel %vm118, %v1416, -inf
    %v1420 = vrot.slane %v1412, 1
    %v1421 = vrot.slane %v1413, 1
    %v1422 = vsel %vm200, %v1420, %v1421
    %v1423 = vsel %vm200, %v1421, %v1420
    %v1424 = vsel %vm119, %v1422, -inf
    %v1425 = vsel %vm120, %v1423, -inf
    %v1426 = vmax.f32 %v1418, %v1424
    %v1427 = vmax.f32 %v1419, %v1425
    %v1428 = vmax.f32 %v1412, %v1426
    %v1429 = vmax.f32 %v1413, %v1427
    %v1430 = vmul.f32 %v314, %v1428
    %v1431 = vmul.f32 %v329, %v1429
    %v1432 = vadd.f32 %v1430, %v332
    %v1433 = vadd.f32 %v1431, %v333
    %v1434 = vmax.f32 %v1396, %v1432
    %v1435 = vmax.f32 %v1397, %v1433
    %1436 = vrot.lane.b32.xlu0 %v1434, 1
    %v1437 = vpop.permute.xlu0 %1436
    %1438 = vrot.lane.b32.xlu0 %v1435, 1
    %v1439 = vpop.permute.xlu0 %1438
    %v1440 = vsel %vm115, %v1437, -inf
    %v1441 = vsel %vm115, %v1439, -inf
    %1442 = vrot.lane.b32.xlu0 %v1434, 127
    %v1443 = vpop.permute.xlu0 %1442
    %1444 = vrot.lane.b32.xlu0 %v1435, 127
    %v1445 = vpop.permute.xlu0 %1444
    %v1446 = vsel %vm116, %v1443, -inf
    %v1447 = vsel %vm116, %v1445, -inf
    %v1448 = vmax.f32 %v1440, %v1446
    %v1449 = vmax.f32 %v1441, %v1447
    %v1450 = vmax.f32 %v1434, %v1448
    %v1451 = vmax.f32 %v1435, %v1449
    %v1452 = vrot.slane %v1450, 7
    %v1453 = vrot.slane %v1451, 7
    %v1454 = vsel %vm191, %v1452, %v1453
    %v1455 = vsel %vm191, %v1453, %v1452
    %v1456 = vsel %vm117, %v1455, -inf
    %v1457 = vsel %vm118, %v1454, -inf
    %v1458 = vrot.slane %v1450, 1
    %v1459 = vrot.slane %v1451, 1
    %v1460 = vsel %vm200, %v1458, %v1459
    %v1461 = vsel %vm200, %v1459, %v1458
    %v1462 = vsel %vm119, %v1460, -inf
    %v1463 = vsel %vm120, %v1461, -inf
    %v1464 = vmax.f32 %v1456, %v1462
    %v1465 = vmax.f32 %v1457, %v1463
    %v1466 = vmax.f32 %v1450, %v1464
    %v1467 = vmax.f32 %v1451, %v1465
    %v1468 = vmul.f32 %v314, %v1466
    %v1469 = vmul.f32 %v329, %v1467
    %v1470 = vadd.f32 %v1468, %v332
    %v1471 = vadd.f32 %v1469, %v333
    %v1472 = vmax.f32 %v1434, %v1470
    %v1473 = vmax.f32 %v1435, %v1471
    %1474 = vrot.lane.b32.xlu0 %v1472, 1
    %v1475 = vpop.permute.xlu0 %1474
    %1476 = vrot.lane.b32.xlu0 %v1473, 1
    %v1477 = vpop.permute.xlu0 %1476
    %v1478 = vsel %vm115, %v1475, -inf
    %v1479 = vsel %vm115, %v1477, -inf
    %1480 = vrot.lane.b32.xlu0 %v1472, 127
    %v1481 = vpop.permute.xlu0 %1480
    %1482 = vrot.lane.b32.xlu0 %v1473, 127
    %v1483 = vpop.permute.xlu0 %1482
    %v1484 = vsel %vm116, %v1481, -inf
    %v1485 = vsel %vm116, %v1483, -inf
    %v1486 = vmax.f32 %v1478, %v1484
    %v1487 = vmax.f32 %v1479, %v1485
    %v1488 = vmax.f32 %v1472, %v1486
    %v1489 = vmax.f32 %v1473, %v1487
    %v1490 = vrot.slane %v1488, 7
    %v1491 = vrot.slane %v1489, 7
    %v1492 = vsel %vm191, %v1490, %v1491
    %v1493 = vsel %vm191, %v1491, %v1490
    %v1494 = vsel %vm117, %v1493, -inf
    %v1495 = vsel %vm118, %v1492, -inf
    %v1496 = vrot.slane %v1488, 1
    %v1497 = vrot.slane %v1489, 1
    %v1498 = vsel %vm200, %v1496, %v1497
    %v1499 = vsel %vm200, %v1497, %v1496
    %v1500 = vsel %vm119, %v1498, -inf
    %v1501 = vsel %vm120, %v1499, -inf
    %v1502 = vmax.f32 %v1494, %v1500
    %v1503 = vmax.f32 %v1495, %v1501
    %v1504 = vmax.f32 %v1488, %v1502
    %v1505 = vmax.f32 %v1489, %v1503
    %v1506 = vmul.f32 %v314, %v1504
    %v1507 = vmul.f32 %v329, %v1505
    %v1508 = vadd.f32 %v1506, %v332
    %v1509 = vadd.f32 %v1507, %v333
    %v1510 = vmax.f32 %v1472, %v1508
    %v1511 = vmax.f32 %v1473, %v1509
    %1512 = vrot.lane.b32.xlu0 %v1510, 1
    %v1513 = vpop.permute.xlu0 %1512
    %1514 = vrot.lane.b32.xlu0 %v1511, 1
    %v1515 = vpop.permute.xlu0 %1514
    %v1516 = vsel %vm115, %v1513, -inf
    %v1517 = vsel %vm115, %v1515, -inf
    %1518 = vrot.lane.b32.xlu0 %v1510, 127
    %v1519 = vpop.permute.xlu0 %1518
    %1520 = vrot.lane.b32.xlu0 %v1511, 127
    %v1521 = vpop.permute.xlu0 %1520
    %v1522 = vsel %vm116, %v1519, -inf
    %v1523 = vsel %vm116, %v1521, -inf
    %v1524 = vmax.f32 %v1516, %v1522
    %v1525 = vmax.f32 %v1517, %v1523
    %v1526 = vmax.f32 %v1510, %v1524
    %v1527 = vmax.f32 %v1511, %v1525
    %v1528 = vrot.slane %v1526, 7
    %v1529 = vrot.slane %v1527, 7
    %v1530 = vsel %vm191, %v1528, %v1529
    %v1531 = vsel %vm191, %v1529, %v1528
    %v1532 = vsel %vm117, %v1531, -inf
    %v1533 = vsel %vm118, %v1530, -inf
    %v1534 = vrot.slane %v1526, 1
    %v1535 = vrot.slane %v1527, 1
    %v1536 = vsel %vm200, %v1534, %v1535
    %v1537 = vsel %vm200, %v1535, %v1534
    %v1538 = vsel %vm119, %v1536, -inf
    %v1539 = vsel %vm120, %v1537, -inf
    %v1540 = vmax.f32 %v1532, %v1538
    %v1541 = vmax.f32 %v1533, %v1539
    %v1542 = vmax.f32 %v1526, %v1540
    %v1543 = vmax.f32 %v1527, %v1541
    %v1544 = vmul.f32 %v314, %v1542
    %v1545 = vmul.f32 %v329, %v1543
    %v1546 = vadd.f32 %v1544, %v332
    %v1547 = vadd.f32 %v1545, %v333
    %v1548 = vmax.f32 %v1510, %v1546
    %v1549 = vmax.f32 %v1511, %v1547
    %1550 = vrot.lane.b32.xlu0 %v1548, 1
    %v1551 = vpop.permute.xlu0 %1550
    %1552 = vrot.lane.b32.xlu0 %v1549, 1
    %v1553 = vpop.permute.xlu0 %1552
    %v1554 = vsel %vm115, %v1551, -inf
    %v1555 = vsel %vm115, %v1553, -inf
    %1556 = vrot.lane.b32.xlu0 %v1548, 127
    %v1557 = vpop.permute.xlu0 %1556
    %1558 = vrot.lane.b32.xlu0 %v1549, 127
    %v1559 = vpop.permute.xlu0 %1558
    %v1560 = vsel %vm116, %v1557, -inf
    %v1561 = vsel %vm116, %v1559, -inf
    %v1562 = vmax.f32 %v1554, %v1560
    %v1563 = vmax.f32 %v1555, %v1561
    %v1564 = vmax.f32 %v1548, %v1562
    %v1565 = vmax.f32 %v1549, %v1563
    %v1566 = vrot.slane %v1564, 7
    %v1567 = vrot.slane %v1565, 7
    %v1568 = vsel %vm191, %v1566, %v1567
    %v1569 = vsel %vm191, %v1567, %v1566
    %v1570 = vsel %vm117, %v1569, -inf
    %v1571 = vsel %vm118, %v1568, -inf
    %v1572 = vrot.slane %v1564, 1
    %v1573 = vrot.slane %v1565, 1
    %v1574 = vsel %vm200, %v1572, %v1573
    %v1575 = vsel %vm200, %v1573, %v1572
    %v1576 = vsel %vm119, %v1574, -inf
    %v1577 = vsel %vm120, %v1575, -inf
    %v1578 = vmax.f32 %v1570, %v1576
    %v1579 = vmax.f32 %v1571, %v1577
    %v1580 = vmax.f32 %v1564, %v1578
    %v1581 = vmax.f32 %v1565, %v1579
    %v1582 = vmul.f32 %v314, %v1580
    %v1583 = vmul.f32 %v329, %v1581
    %v1584 = vadd.f32 %v1582, %v332
    %v1585 = vadd.f32 %v1583, %v333
    %v1586 = vmax.f32 %v1548, %v1584
    %v1587 = vmax.f32 %v1549, %v1585
    %1588 = vrot.lane.b32.xlu0 %v1586, 1
    %v1589 = vpop.permute.xlu0 %1588
    %1590 = vrot.lane.b32.xlu0 %v1587, 1
    %v1591 = vpop.permute.xlu0 %1590
    %v1592 = vsel %vm115, %v1589, -inf
    %v1593 = vsel %vm115, %v1591, -inf
    %1594 = vrot.lane.b32.xlu0 %v1586, 127
    %v1595 = vpop.permute.xlu0 %1594
    %1596 = vrot.lane.b32.xlu0 %v1587, 127
    %v1597 = vpop.permute.xlu0 %1596
    %v1598 = vsel %vm116, %v1595, -inf
    %v1599 = vsel %vm116, %v1597, -inf
    %v1600 = vmax.f32 %v1592, %v1598
    %v1601 = vmax.f32 %v1593, %v1599
    %v1602 = vmax.f32 %v1586, %v1600
    %v1603 = vmax.f32 %v1587, %v1601
    %v1604 = vrot.slane %v1602, 7
    %v1605 = vrot.slane %v1603, 7
    %v1606 = vsel %vm191, %v1604, %v1605
    %v1607 = vsel %vm191, %v1605, %v1604
    %v1608 = vsel %vm117, %v1607, -inf
    %v1609 = vsel %vm118, %v1606, -inf
    %v1610 = vrot.slane %v1602, 1
    %v1611 = vrot.slane %v1603, 1
    %v1612 = vsel %vm200, %v1610, %v1611
    %v1613 = vsel %vm200, %v1611, %v1610
    %v1614 = vsel %vm119, %v1612, -inf
    %v1615 = vsel %vm120, %v1613, -inf
    %v1616 = vmax.f32 %v1608, %v1614
    %v1617 = vmax.f32 %v1609, %v1615
    %v1618 = vmax.f32 %v1602, %v1616
    %v1619 = vmax.f32 %v1603, %v1617
    %v1620 = vmul.f32 %v314, %v1618
    %v1621 = vmul.f32 %v329, %v1619
    %v1622 = vadd.f32 %v1620, %v332
    %v1623 = vadd.f32 %v1621, %v333
    %v1624 = vmax.f32 %v1586, %v1622
    %v1625 = vmax.f32 %v1587, %v1623
    %1626 = vrot.lane.b32.xlu0 %v1624, 1
    %v1627 = vpop.permute.xlu0 %1626
    %1628 = vrot.lane.b32.xlu0 %v1625, 1
    %v1629 = vpop.permute.xlu0 %1628
    %v1630 = vsel %vm115, %v1627, -inf
    %v1631 = vsel %vm115, %v1629, -inf
    %1632 = vrot.lane.b32.xlu0 %v1624, 127
    %v1633 = vpop.permute.xlu0 %1632
    %1634 = vrot.lane.b32.xlu0 %v1625, 127
    %v1635 = vpop.permute.xlu0 %1634
    %v1636 = vsel %vm116, %v1633, -inf
    %v1637 = vsel %vm116, %v1635, -inf
    %v1638 = vmax.f32 %v1630, %v1636
    %v1639 = vmax.f32 %v1631, %v1637
    %v1640 = vmax.f32 %v1624, %v1638
    %v1641 = vmax.f32 %v1625, %v1639
    %v1642 = vrot.slane %v1640, 7
    %v1643 = vrot.slane %v1641, 7
    %v1644 = vsel %vm191, %v1642, %v1643
    %v1645 = vsel %vm191, %v1643, %v1642
    %v1646 = vsel %vm117, %v1645, -inf
    %v1647 = vsel %vm118, %v1644, -inf
    %v1648 = vrot.slane %v1640, 1
    %v1649 = vrot.slane %v1641, 1
    %v1650 = vsel %vm200, %v1648, %v1649
    %v1651 = vsel %vm200, %v1649, %v1648
    %v1652 = vsel %vm119, %v1650, -inf
    %v1653 = vsel %vm120, %v1651, -inf
    %v1654 = vmax.f32 %v1646, %v1652
    %v1655 = vmax.f32 %v1647, %v1653
    %v1656 = vmax.f32 %v1640, %v1654
    %v1657 = vmax.f32 %v1641, %v1655
    %v1658 = vmul.f32 %v314, %v1656
    %v1659 = vmul.f32 %v329, %v1657
    %v1660 = vadd.f32 %v1658, %v332
    %v1661 = vadd.f32 %v1659, %v333
    %v1662 = vmax.f32 %v1624, %v1660
    %v1663 = vmax.f32 %v1625, %v1661
    %1664 = vst [vmem:[#allocation11] sm:$0xff] %v1662
    %1665 = vst [vmem:[#allocation11 + $0x8] sm:$0xff] %v1663
    %1666 = vst [vmem:[#allocation12] sm:$0xff] %v314
    %1667 = vst [vmem:[#allocation12 + $0x8] sm:$0xff] %v329
    // Predicated region
    $region34: #{tpu_custom_call.1} parent=1 // pred_check
      _
    $region35: #{tpu_custom_call.1} parent=1 // pred_check_branch
      %1669 = sbr.rel (0) target = $region37
    $region36: #{tpu_custom_call.1} parent=1 // pred_region
      %1671 = vsyncadd [#allocation4], 0
      %s1672 = sshll.u32 [#allocation11], 4
      %s1673 = int_to_ptr.vmem [resolvable:$true] %s1672
      %s1674 = sshll.u32 %s4, 4
      %s1675 = int_to_ptr.hbm [resolvable:$true] %s1674
      %1680 = dma.vmem_to_hbm [thread:$0]  %s1673, 256, %s1675, [#allocation4], 128, 128, 8
    $region37: #{tpu_custom_call.1} parent=1 // pred_fallthru
      _
    // Predicated region
    $region38: #{tpu_custom_call.1} parent=1 // pred_check
      _
    $region39: #{tpu_custom_call.1} parent=1 // pred_check_branch
      %1682 = sbr.rel (0) target = $region41
    $region40: #{tpu_custom_call.1} parent=1 // pred_region
      %1684 = vsyncadd [#allocation13], 0
      %s1685 = sshll.u32 [#allocation12], 4
      %s1686 = int_to_ptr.vmem [resolvable:$true] %s1685
      %s1687 = sshll.u32 %s5, 4
      %s1688 = int_to_ptr.hbm [resolvable:$true] %s1687
      %1693 = dma.vmem_to_hbm [thread:$0]  %s1686, 256, %s1688, [#allocation13], 128, 128, 8
    $region41: #{tpu_custom_call.1} parent=1 // pred_fallthru
      _
    // Predicated region
    $region42: #{tpu_custom_call.1} parent=1 // pred_check
      _
    $region43: #{tpu_custom_call.1} parent=1 // pred_check_branch
      %1695 = sbr.rel (0) target = $region45
    $region44: #{tpu_custom_call.1} parent=1 // pred_region
      %1697 = dma.done [#allocation4], 256
    $region45: #{tpu_custom_call.1} parent=1 // pred_fallthru
      _
    // Predicated region
    $region46: #{tpu_custom_call.1} parent=1 // pred_check
      _
    $region47: #{tpu_custom_call.1} parent=1 // pred_check_branch
      %1699 = sbr.rel (0) target = $region49
    $region48: #{tpu_custom_call.1} parent=1 // pred_region
      %1701 = dma.done [#allocation13], 256
    $region49: #{tpu_custom_call.1} parent=1 // pred_fallthru
      _
    %1702 = vsyncpa [#allocation3], 1
    %1703 = vsyncpa [#allocation4], 1
    %1704 = vsyncpa [#allocation13], 1
    %1705 = vsyncpa [#allocation5], 1
    %1706 = vsyncpa [#allocation8], 1
    %1707 = vsyncpa [#allocation6], 1

</llo_original>
